<compile_context>
chip_gen: v7x
topology: tpu7x:2x2x1
jax: 0.10.0
libtpu: 0.0.40
codegen_flags: <defaults>
</compile_context>

<pallas_src>
import functools

import jax
import jax.numpy as jnp
from jax.experimental import pallas as pl
from jax.experimental.pallas import tpu as pltpu

EPS = 1e-5
HIGH = jax.lax.Precision.HIGHEST
VMEM_LIMIT = 32 * 1024 * 1024     # raise v5e's 16 MiB default; safe on v6e/v7x
SMALL_M_MAX = 64                  # <= this many rows -> single-pass (N-tiled) path


# --------------------------------------------------------------------------- #
# Small helpers                                                                #
# --------------------------------------------------------------------------- #
def _round_up(n, m):
    return ((n + m - 1) // m) * m


def _pad2d(a, shape, value=0.0):
    pr, pc = shape[0] - a.shape[0], shape[1] - a.shape[1]
    if pr == 0 and pc == 0:
        return a
    return jnp.pad(a, ((0, pr), (0, pc)), constant_values=value)


def _pick_block_m(m):
    # Bigger M tiles amortize the ~0.35us/step overhead; capped so double-buffered
    # bf16 X tiles + the f32 Y tile stay well inside v7x's 32 MiB scoped VMEM
    # (64 MiB physical); v5e/v6e have the same or more headroom.
    if m >= 4096:
        return 1024
    if m >= 1024:
        return 512
    return 128


# --------------------------------------------------------------------------- #
# Kernels                                                                      #
# --------------------------------------------------------------------------- #
def _fused_small_kernel(x_ref, w_ref, g_ref, b_ref, o_ref, *, inv_m, relu):
    """Full-M resident, one N tile per grid step: matmul -> BN -> (ReLU)."""
    y = jnp.dot(x_ref[...], w_ref[...], preferred_element_type=jnp.float32)
    mean = jnp.sum(y, axis=0, keepdims=True) * inv_m
    var = jnp.maximum(jnp.sum(y * y, axis=0, keepdims=True) * inv_m - mean * mean, 0.0)
    y = (y - mean) * jax.lax.rsqrt(var + EPS) * g_ref[...] + b_ref[...]
    if relu:
        y = jnp.maximum(y, 0.0)
    o_ref[...] = y.astype(o_ref.dtype)


def _matmul_colstats_kernel(x_ref, w_ref, y_ref, sum_ref, sq_ref):
    """Pass 1 of the large-M path: tiled matmul + per-column sum / sum-of-squares.

    Grid = (n_tiles, m_tiles); the M axis (program_id(1)) is the inner, 'arbitrary'
    axis, so sum_ref / sq_ref (block index constant in M) stay resident and act as
    accumulators. Zero-padded X rows contribute exactly 0 because no bias is added.
    """
    @pl.when(pl.program_id(1) == 0)
    def _():
        sum_ref[...] = jnp.zeros_like(sum_ref)
        sq_ref[...] = jnp.zeros_like(sq_ref)

    y = jnp.dot(x_ref[...], w_ref[...], preferred_element_type=jnp.float32)
    y_ref[...] = y
    sum_ref[...] += jnp.sum(y, axis=0, keepdims=True)
    sq_ref[...] += jnp.sum(y * y, axis=0, keepdims=True)


def _bn_apply_kernel(y_ref, sum_ref, sq_ref, g_ref, b_ref, o_ref, *, inv_m, relu):
    """Pass 2 of the large-M path: normalize with batch stats, scale/shift, ReLU."""
    mean = sum_ref[...] * inv_m
    var = jnp.maximum(sq_ref[...] * inv_m - mean * mean, 0.0)
    y = (y_ref[...] - mean) * jax.lax.rsqrt(var + EPS) * g_ref[...] + b_ref[...]
    if relu:
        y = jnp.maximum(y, 0.0)
    o_ref[...] = y.astype(o_ref.dtype)


# --------------------------------------------------------------------------- #
# Fused (matmul -> training-mode BatchNorm -> optional ReLU) wrapper           #
# --------------------------------------------------------------------------- #
def fused_linear_bn(x, w_kn, gamma, beta, *, relu):
    """x: (M, K), w_kn: (K, N). Returns BN_train(x @ w_kn) (* ReLU), f32 (M, N)."""
    M, K = x.shape
    K2, N = w_kn.shape
    assert K == K2

    # Lane-dense N: zero-pad weight columns (gamma pad = 1, beta pad = 0); padded
    # columns are sliced off below, so they never feed the next layer.
    n_pad = _round_up(N, 128)
    tn = 256 if n_pad % 256 == 0 else 128
    n_tiles = n_pad // tn

    w_p = _pad2d(w_kn.astype(jnp.float32), (K, n_pad)).astype(jnp.bfloat16)
    g_p = _pad2d(gamma.reshape(1, N).astype(jnp.float32), (1, n_pad), value=1.0)
    b_p = _pad2d(beta.reshape(1, N).astype(jnp.float32), (1, n_pad))
    x_bf = x.astype(jnp.bfloat16)
    inv_m = 1.0 / M   # true row count; zero-padded rows contribute 0 (no bias added)

    if M <= SMALL_M_MAX:
        # Linear layers (M = batch): full M resident, tile over N -> single-pass BN.
        m_pad = _round_up(M, 8)
        x_p = _pad2d(x_bf, (m_pad, K))
        out = pl.pallas_call(
            functools.partial(_fused_small_kernel, inv_m=inv_m, relu=relu),
            out_shape=jax.ShapeDtypeStruct((m_pad, n_pad), jnp.float32),
            grid=(n_tiles,),
            in_specs=[
                pl.BlockSpec((m_pad, K), lambda j: (0, 0)),
                pl.BlockSpec((K, tn), lambda j: (0, j)),
                pl.BlockSpec((1, tn), lambda j: (0, j)),
                pl.BlockSpec((1, tn), lambda j: (0, j)),
            ],
            out_specs=pl.BlockSpec((m_pad, tn), lambda j: (0, j)),
            compiler_params=pltpu.CompilerParams(
                dimension_semantics=("parallel",),
                vmem_limit_bytes=VMEM_LIMIT),
        )(x_p, w_p, g_p, b_p)
        return out[:M, :N]

    # Conv patch matrices (M = B*OH*OW): M-tiled, two-pass BN.
    tm = _pick_block_m(M)
    m_pad = _round_up(M, tm)
    m_tiles = m_pad // tm
    x_p = _pad2d(x_bf, (m_pad, K))

    y_full, col_sum, col_sq = pl.pallas_call(
        _matmul_colstats_kernel,
        out_shape=(jax.ShapeDtypeStruct((m_pad, n_pad), jnp.float32),
                   jax.ShapeDtypeStruct((1, n_pad), jnp.float32),
                   jax.ShapeDtypeStruct((1, n_pad), jnp.float32)),
        grid=(n_tiles, m_tiles),
        in_specs=[
            pl.BlockSpec((tm, K), lambda j, i: (i, 0)),
            pl.BlockSpec((K, tn), lambda j, i: (0, j)),
        ],
        out_specs=(
            pl.BlockSpec((tm, tn), lambda j, i: (i, j)),
            pl.BlockSpec((1, tn), lambda j, i: (0, j)),
            pl.BlockSpec((1, tn), lambda j, i: (0, j)),
        ),
        compiler_params=pltpu.CompilerParams(
            dimension_semantics=("parallel", "arbitrary"),
            vmem_limit_bytes=VMEM_LIMIT),
    )(x_p, w_p)

    out = pl.pallas_call(
        functools.partial(_bn_apply_kernel, inv_m=inv_m, relu=relu),
        out_shape=jax.ShapeDtypeStruct((m_pad, n_pad), jnp.float32),
        grid=(n_tiles, m_tiles),
        in_specs=[
            pl.BlockSpec((tm, tn), lambda j, i: (i, j)),
            pl.BlockSpec((1, tn), lambda j, i: (0, j)),
            pl.BlockSpec((1, tn), lambda j, i: (0, j)),
            pl.BlockSpec((1, tn), lambda j, i: (0, j)),
            pl.BlockSpec((1, tn), lambda j, i: (0, j)),
        ],
        out_specs=pl.BlockSpec((tm, tn), lambda j, i: (i, j)),
        compiler_params=pltpu.CompilerParams(
            dimension_semantics=("parallel", "parallel"),
            vmem_limit_bytes=VMEM_LIMIT),
    )(y_full, col_sum, col_sq, g_p, b_p)
    return out[:M, :N]


# --------------------------------------------------------------------------- #
# Glue: NHWC im2col (feature order = (kh, kw, cin))                            #
# --------------------------------------------------------------------------- #
def im2col_nhwc(x, kh, kw, stride):
    """x: (B, H, W, C) -> (B*OH*OW, kh*kw*C); feature index = (i*kw + j)*C + c."""
    B, H, W, C = x.shape
    oh = (H - kh) // stride + 1
    ow = (W - kw) // stride + 1
    cols = []
    for i in range(kh):
        for j in range(kw):
            cols.append(x[:, i:i + stride * oh:stride, j:j + stride * ow:stride, :])
    p = jnp.concatenate(cols, axis=-1)                 # (B, oh, ow, kh*kw*C)
    return p.reshape(B * oh * ow, kh * kw * C), oh, ow


# --------------------------------------------------------------------------- #
# AtariNet forward (Pallas path)                                               #
# --------------------------------------------------------------------------- #
def atari_net_forward(x_nchw, params, image_size,
                      conv1_channels=16, conv2_channels=32,
                      k1=8, k2=4, s1=4, s2=2):
    B = x_nchw.shape[0]
    x = jnp.transpose(x_nchw, (0, 2, 3, 1))            # NHWC once; stay NHWC after

    # conv1 + BN2d + ReLU   (bias omitted in kernel: cancelled by training-mode BN)
    w1, _b1, g1, be1 = params["conv1"]
    p1, oh1, ow1 = im2col_nhwc(x, k1, k1, s1)
    w1m = jnp.transpose(w1, (2, 3, 1, 0)).reshape(-1, conv1_channels)
    y1 = fused_linear_bn(p1, w1m, g1, be1, relu=True)
    y1 = y1.reshape(B, oh1, ow1, conv1_channels)       # NHWC (no transpose back)

    # conv2 + BN2d + ReLU
    w2, _b2, g2, be2 = params["conv2"]
    p2, oh2, ow2 = im2col_nhwc(y1, k2, k2, s2)
    w2m = jnp.transpose(w2, (2, 3, 1, 0)).reshape(-1, conv2_channels)
    y2 = fused_linear_bn(p2, w2m, g2, be2, relu=True)
    y2 = y2.reshape(B, oh2, ow2, conv2_channels)       # NHWC

    # flatten in NHWC order; lin1 weight columns permuted to match PyTorch's
    # NCHW .view(-1, linear_input_size) semantics.
    feat = y2.reshape(B, -1)

    w3, _b3, g3, be3 = params["lin1"]
    hidden = w3.shape[0]
    w3m = (w3.reshape(hidden, conv2_channels, oh2, ow2)
             .transpose(0, 2, 3, 1).reshape(hidden, -1).T)
    h = fused_linear_bn(feat, w3m, g3, be3, relu=True)

    # lin2 + BN1d (no ReLU)
    w4, _b4, g4, be4 = params["lin2"]
    out = fused_linear_bn(h, w4.T, g4, be4, relu=False)
    return out.reshape(B, image_size, image_size)


# --------------------------------------------------------------------------- #
# Deterministic parameter init (shapes follow nn.Module __init__)              #
# --------------------------------------------------------------------------- #
def init_params(key, channels, image_size, c1=16, c2=32, k1=8, k2=4, s1=4, s2=2,
                hidden=256):
    o1 = (image_size - k1) // s1 + 1
    o2 = (o1 - k2) // s2 + 1
    lin_in = c2 * o2 * o2
    out_dim = image_size ** 2
    ks = jax.random.split(key, 8)
    w = lambda k, shp: 0.05 * jax.random.normal(k, shp, jnp.float32)
    ones = lambda n: jnp.ones((n,), jnp.float32)
    zeros = lambda n: jnp.zeros((n,), jnp.float32)
    return {
        "conv1": (w(ks[0], (c1, channels, k1, k1)), w(ks[1], (c1,)), ones(c1), zeros(c1)),
        "conv2": (w(ks[2], (c2, c1, k2, k2)), w(ks[3], (c2,)), ones(c2), zeros(c2)),
        "lin1": (w(ks[4], (hidden, lin_in)), w(ks[5], (hidden,)), ones(hidden), zeros(hidden)),
        "lin2": (w(ks[6], (out_dim, hidden)), w(ks[7], (out_dim,)), ones(out_dim), zeros(out_dim)),
    }


# --------------------------------------------------------------------------- #
# Pure-JAX f32 reference (lax.conv, with biases) for a correctness cross-check #
# --------------------------------------------------------------------------- #
def reference_forward(x, params, image_size):
    def bn(y, g, b, axes):
        m = jnp.mean(y, axis=axes, keepdims=True)
        v = jnp.mean((y - m) ** 2, axis=axes, keepdims=True)
        return (y - m) * jax.lax.rsqrt(v + EPS) * g + b

    dn = ("NCHW", "OIHW", "NCHW")
    w1, b1, g1, be1 = params["conv1"]
    y = jax.lax.conv_general_dilated(x, w1, (4, 4), "VALID", dimension_numbers=dn,
                                     precision=HIGH) + b1.reshape(1, -1, 1, 1)
    y = jnp.maximum(bn(y, g1.reshape(1, -1, 1, 1), be1.reshape(1, -1, 1, 1), (0, 2, 3)), 0)

    w2, b2, g2, be2 = params["conv2"]
    y = jax.lax.conv_general_dilated(y, w2, (2, 2), "VALID", dimension_numbers=dn,
                                     precision=HIGH) + b2.reshape(1, -1, 1, 1)
    y = jnp.maximum(bn(y, g2.reshape(1, -1, 1, 1), be2.reshape(1, -1, 1, 1), (0, 2, 3)), 0)

    B = x.shape[0]
    y = y.reshape(B, -1)

    w3, b3, g3, be3 = params["lin1"]
    y = jnp.dot(y, w3.T, precision=HIGH) + b3
    y = jnp.maximum(bn(y, g3, be3, (0,)), 0)

    w4, b4, g4, be4 = params["lin2"]
    y = jnp.dot(y, w4.T, precision=HIGH) + b4
    y = bn(y, g4, be4, (0,))
    return y.reshape(B, image_size, image_size)


if __name__ == "__main__":
    # 28x28 -> conv1 out 6x6, conv2 out 2x2, lin_in = 128, out_dim = 784.
    # BATCH=16 exercises both paths: conv1 patch matrix M=576 (M-tiled two-pass BN,
    # 5 M-tiles incl. zero-padded rows), conv2/lin layers take the single-pass path.
    BATCH, CHANNELS, IMAGE_SIZE = 16, 4, 28

    key = jax.random.PRNGKey(0)
    kx, kp = jax.random.split(key)
    x = jax.random.normal(kx, (BATCH, CHANNELS, IMAGE_SIZE, IMAGE_SIZE), jnp.float32)
    params = init_params(kp, CHANNELS, IMAGE_SIZE)

    fwd = jax.jit(lambda inp: atari_net_forward(inp, params, IMAGE_SIZE))
    out = fwd(x)
    jax.block_until_ready(out)

    ref = jax.jit(lambda inp: reference_forward(inp, params, IMAGE_SIZE))(x)
    jax.block_until_ready(ref)

    assert out.shape == (BATCH, IMAGE_SIZE, IMAGE_SIZE)
    assert bool(jnp.all(jnp.isfinite(out)))
    # Relative L2 error vs. the f32 reference (kernel runs bf16 matmuls; BN outputs
    # are O(1), so a layout/permutation bug would give rel_err ~ 1).
    rel_err = float(jnp.linalg.norm(out - ref) / jnp.linalg.norm(ref))
    assert rel_err < 5e-2, rel_err
    print("KERNEL_OK")
</pallas_src>

<mosaic_0001>
module attributes {stable_mosaic.version = 11 : i64} {
  func.func @_matmul_colstats_kernel(%arg0: i32, %arg1: i32, %arg2: memref<128x256xbf16, #tpu.memory_space<vmem>>, %arg3: memref<256x128xbf16, #tpu.memory_space<vmem>>, %arg4: memref<128x128xf32, #tpu.memory_space<vmem>>, %arg5: memref<1x128xf32, #tpu.memory_space<vmem>>, %arg6: memref<1x128xf32, #tpu.memory_space<vmem>>) attributes {dimension_semantics = [#tpu.dimension_semantics<parallel>, #tpu.dimension_semantics<arbitrary>], iteration_bounds = array<i64: 1, 5>, scalar_prefetch = 0 : i64, scratch_operands = 0 : i64, tpu.core_type = #tpu.core_type<tc>, window_params = [{transform_indices = @transform_0, window_bounds = array<i64: 128, 256>}, {transform_indices = @transform_1, window_bounds = array<i64: 256, 128>}, {transform_indices = @transform_2, window_bounds = array<i64: 128, 128>}, {transform_indices = @transform_3, window_bounds = array<i64: 1, 128>}, {transform_indices = @transform_4, window_bounds = array<i64: 1, 128>}]} {
    %c0_i32 = arith.constant 0 : i32
    %0 = arith.cmpi eq, %arg1, %c0_i32 : i32
    %1 = arith.extui %0 : i1 to i32
    %c0_i32_0 = arith.constant 0 : i32
    %2 = arith.cmpi ne, %1, %c0_i32_0 : i32
    scf.if %2 {
      %cst_16 = arith.constant 0.000000e+00 : f32
      %18 = vector.broadcast %cst_16 : f32 to vector<1x128xf32>
      %c0_17 = arith.constant 0 : index
      %c0_18 = arith.constant 0 : index
      %19 = vector.load %arg5[%c0_17, %c0_18] : memref<1x128xf32, #tpu.memory_space<vmem>>, vector<1x128xf32>
      tpu.vector_store %arg5[%c0_17, %c0_18], %18 {strides = array<i32>} : memref<1x128xf32, #tpu.memory_space<vmem>>, vector<1x128xf32>,
      %cst_19 = arith.constant 0.000000e+00 : f32
      %20 = vector.broadcast %cst_19 : f32 to vector<1x128xf32>
      %c0_20 = arith.constant 0 : index
      %c0_21 = arith.constant 0 : index
      %21 = vector.load %arg6[%c0_20, %c0_21] : memref<1x128xf32, #tpu.memory_space<vmem>>, vector<1x128xf32>
      tpu.vector_store %arg6[%c0_20, %c0_21], %20 {strides = array<i32>} : memref<1x128xf32, #tpu.memory_space<vmem>>, vector<1x128xf32>,
    } else {
    }
    %c0 = arith.constant 0 : index
    %c0_1 = arith.constant 0 : index
    %3 = vector.load %arg2[%c0, %c0_1] : memref<128x256xbf16, #tpu.memory_space<vmem>>, vector<128x256xbf16>
    %c0_2 = arith.constant 0 : index
    %c0_3 = arith.constant 0 : index
    %4 = vector.load %arg3[%c0_2, %c0_3] : memref<256x128xbf16, #tpu.memory_space<vmem>>, vector<256x128xbf16>
    %cst = arith.constant dense<0.000000e+00> : vector<128x128xf32>
    %5 = tpu.matmul %3, %4, %cst {dimension_numbers = #tpu.dot_dimension_numbers<[1], [0], [0], [1], [0, 0, 1, 1], [], []>} : vector<128x256xbf16>, vector<256x128xbf16>, vector<128x128xf32> -> vector<128x128xf32>
    %c0_4 = arith.constant 0 : index
    %c0_5 = arith.constant 0 : index
    %6 = vector.load %arg4[%c0_4, %c0_5] : memref<128x128xf32, #tpu.memory_space<vmem>>, vector<128x128xf32>
    tpu.vector_store %arg4[%c0_4, %c0_5], %5 {strides = array<i32>} : memref<128x128xf32, #tpu.memory_space<vmem>>, vector<128x128xf32>,
    %c0_6 = arith.constant 0 : index
    %c0_7 = arith.constant 0 : index
    %7 = vector.load %arg5[%c0_6, %c0_7] : memref<1x128xf32, #tpu.memory_space<vmem>>, vector<1x128xf32>
    %cst_8 = arith.constant dense<0.000000e+00> : vector<128xf32>
    %8 = vector.multi_reduction <add>, %5, %cst_8 [0] : vector<128x128xf32> to vector<128xf32>
    %9 = vector.shape_cast %8 : vector<128xf32> to vector<1x128xf32>
    %10 = arith.addf %7, %9 : vector<1x128xf32>
    %c0_9 = arith.constant 0 : index
    %c0_10 = arith.constant 0 : index
    %11 = vector.load %arg5[%c0_9, %c0_10] : memref<1x128xf32, #tpu.memory_space<vmem>>, vector<1x128xf32>
    tpu.vector_store %arg5[%c0_9, %c0_10], %10 {strides = array<i32>} : memref<1x128xf32, #tpu.memory_space<vmem>>, vector<1x128xf32>,
    %c0_11 = arith.constant 0 : index
    %c0_12 = arith.constant 0 : index
    %12 = vector.load %arg6[%c0_11, %c0_12] : memref<1x128xf32, #tpu.memory_space<vmem>>, vector<1x128xf32>
    %13 = arith.mulf %5, %5 : vector<128x128xf32>
    %cst_13 = arith.constant dense<0.000000e+00> : vector<128xf32>
    %14 = vector.multi_reduction <add>, %13, %cst_13 [0] : vector<128x128xf32> to vector<128xf32>
    %15 = vector.shape_cast %14 : vector<128xf32> to vector<1x128xf32>
    %16 = arith.addf %12, %15 : vector<1x128xf32>
    %c0_14 = arith.constant 0 : index
    %c0_15 = arith.constant 0 : index
    %17 = vector.load %arg6[%c0_14, %c0_15] : memref<1x128xf32, #tpu.memory_space<vmem>>, vector<1x128xf32>
    tpu.vector_store %arg6[%c0_14, %c0_15], %16 {strides = array<i32>} : memref<1x128xf32, #tpu.memory_space<vmem>>, vector<1x128xf32>,
    return
  }
  func.func @transform_0(%arg0: i32, %arg1: i32) -> (i32, i32) {
    %c0_i32 = arith.constant 0 : i32
    %c0_i32_0 = arith.constant 0 : i32
    return %arg1, %c0_i32 : i32, i32
  }
  func.func @transform_1(%arg0: i32, %arg1: i32) -> (i32, i32) {
    %c0_i32 = arith.constant 0 : i32
    %c0_i32_0 = arith.constant 0 : i32
    return %c0_i32, %arg0 : i32, i32
  }
  func.func @transform_2(%arg0: i32, %arg1: i32) -> (i32, i32) {
    %c0_i32 = arith.constant 0 : i32
    return %arg1, %arg0 : i32, i32
  }
  func.func @transform_3(%arg0: i32, %arg1: i32) -> (i32, i32) {
    %c0_i32 = arith.constant 0 : i32
    %c0_i32_0 = arith.constant 0 : i32
    return %c0_i32, %arg0 : i32, i32
  }
  func.func @transform_4(%arg0: i32, %arg1: i32) -> (i32, i32) {
    %c0_i32 = arith.constant 0 : i32
    %c0_i32_0 = arith.constant 0 : i32
    return %c0_i32, %arg0 : i32, i32
  }
}

module attributes {stable_mosaic.version = 11 : i64} {
  func.func @_bn_apply_kernel(%arg0: i32, %arg1: i32, %arg2: memref<128x128xf32, #tpu.memory_space<vmem>>, %arg3: memref<1x128xf32, #tpu.memory_space<vmem>>, %arg4: memref<1x128xf32, #tpu.memory_space<vmem>>, %arg5: memref<1x128xf32, #tpu.memory_space<vmem>>, %arg6: memref<1x128xf32, #tpu.memory_space<vmem>>, %arg7: memref<128x128xf32, #tpu.memory_space<vmem>>) attributes {dimension_semantics = [#tpu.dimension_semantics<parallel>, #tpu.dimension_semantics<parallel>], iteration_bounds = array<i64: 1, 5>, scalar_prefetch = 0 : i64, scratch_operands = 0 : i64, tpu.core_type = #tpu.core_type<tc>, window_params = [{transform_indices = @transform_0, window_bounds = array<i64: 128, 128>}, {transform_indices = @transform_1, window_bounds = array<i64: 1, 128>}, {transform_indices = @transform_2, window_bounds = array<i64: 1, 128>}, {transform_indices = @transform_3, window_bounds = array<i64: 1, 128>}, {transform_indices = @transform_4, window_bounds = array<i64: 1, 128>}, {transform_indices = @transform_5, window_bounds = array<i64: 128, 128>}]} {
    %c0 = arith.constant 0 : index
    %c0_0 = arith.constant 0 : index
    %0 = vector.load %arg3[%c0, %c0_0] : memref<1x128xf32, #tpu.memory_space<vmem>>, vector<1x128xf32>
    %cst = arith.constant 0.00173611112 : f32
    %1 = vector.broadcast %cst : f32 to vector<1x128xf32>
    %2 = arith.mulf %0, %1 : vector<1x128xf32>
    %c0_1 = arith.constant 0 : index
    %c0_2 = arith.constant 0 : index
    %3 = vector.load %arg4[%c0_1, %c0_2] : memref<1x128xf32, #tpu.memory_space<vmem>>, vector<1x128xf32>
    %cst_3 = arith.constant 0.00173611112 : f32
    %4 = vector.broadcast %cst_3 : f32 to vector<1x128xf32>
    %5 = arith.mulf %3, %4 : vector<1x128xf32>
    %6 = arith.mulf %2, %2 : vector<1x128xf32>
    %7 = arith.subf %5, %6 : vector<1x128xf32>
    %cst_4 = arith.constant 0.000000e+00 : f32
    %8 = vector.broadcast %cst_4 : f32 to vector<1x128xf32>
    %9 = arith.maximumf %7, %8 : vector<1x128xf32>
    %c0_5 = arith.constant 0 : index
    %c0_6 = arith.constant 0 : index
    %10 = vector.load %arg2[%c0_5, %c0_6] : memref<128x128xf32, #tpu.memory_space<vmem>>, vector<128x128xf32>
    %11 = vector.broadcast %2 : vector<1x128xf32> to vector<128x128xf32>
    %12 = arith.subf %10, %11 : vector<128x128xf32>
    %cst_7 = arith.constant 9.99999974E-6 : f32
    %13 = vector.broadcast %cst_7 : f32 to vector<1x128xf32>
    %14 = arith.addf %9, %13 : vector<1x128xf32>
    %15 = math.rsqrt %14 : vector<1x128xf32>
    %16 = vector.broadcast %15 : vector<1x128xf32> to vector<128x128xf32>
    %17 = arith.mulf %12, %16 : vector<128x128xf32>
    %c0_8 = arith.constant 0 : index
    %c0_9 = arith.constant 0 : index
    %18 = vector.load %arg5[%c0_8, %c0_9] : memref<1x128xf32, #tpu.memory_space<vmem>>, vector<1x128xf32>
    %19 = vector.broadcast %18 : vector<1x128xf32> to vector<128x128xf32>
    %20 = arith.mulf %17, %19 : vector<128x128xf32>
    %c0_10 = arith.constant 0 : index
    %c0_11 = arith.constant 0 : index
    %21 = vector.load %arg6[%c0_10, %c0_11] : memref<1x128xf32, #tpu.memory_space<vmem>>, vector<1x128xf32>
    %22 = vector.broadcast %21 : vector<1x128xf32> to vector<128x128xf32>
    %23 = arith.addf %20, %22 : vector<128x128xf32>
    %cst_12 = arith.constant 0.000000e+00 : f32
    %24 = vector.broadcast %cst_12 : f32 to vector<128x128xf32>
    %25 = arith.maximumf %23, %24 : vector<128x128xf32>
    %c0_13 = arith.constant 0 : index
    %c0_14 = arith.constant 0 : index
    %26 = vector.load %arg7[%c0_13, %c0_14] : memref<128x128xf32, #tpu.memory_space<vmem>>, vector<128x128xf32>
    tpu.vector_store %arg7[%c0_13, %c0_14], %25 {strides = array<i32>} : memref<128x128xf32, #tpu.memory_space<vmem>>, vector<128x128xf32>,
    return
  }
  func.func @transform_0(%arg0: i32, %arg1: i32) -> (i32, i32) {
    %c0_i32 = arith.constant 0 : i32
    return %arg1, %arg0 : i32, i32
  }
  func.func @transform_1(%arg0: i32, %arg1: i32) -> (i32, i32) {
    %c0_i32 = arith.constant 0 : i32
    %c0_i32_0 = arith.constant 0 : i32
    return %c0_i32, %arg0 : i32, i32
  }
  func.func @transform_2(%arg0: i32, %arg1: i32) -> (i32, i32) {
    %c0_i32 = arith.constant 0 : i32
    %c0_i32_0 = arith.constant 0 : i32
    return %c0_i32, %arg0 : i32, i32
  }
  func.func @transform_3(%arg0: i32, %arg1: i32) -> (i32, i32) {
    %c0_i32 = arith.constant 0 : i32
    %c0_i32_0 = arith.constant 0 : i32
    return %c0_i32, %arg0 : i32, i32
  }
  func.func @transform_4(%arg0: i32, %arg1: i32) -> (i32, i32) {
    %c0_i32 = arith.constant 0 : i32
    %c0_i32_0 = arith.constant 0 : i32
    return %c0_i32, %arg0 : i32, i32
  }
  func.func @transform_5(%arg0: i32, %arg1: i32) -> (i32, i32) {
    %c0_i32 = arith.constant 0 : i32
    return %arg1, %arg0 : i32, i32
  }
}

module attributes {stable_mosaic.version = 11 : i64} {
  func.func @_fused_small_kernel(%arg0: i32, %arg1: memref<64x256xbf16, #tpu.memory_space<vmem>>, %arg2: memref<256x128xbf16, #tpu.memory_space<vmem>>, %arg3: memref<1x128xf32, #tpu.memory_space<vmem>>, %arg4: memref<1x128xf32, #tpu.memory_space<vmem>>, %arg5: memref<64x128xf32, #tpu.memory_space<vmem>>) attributes {dimension_semantics = [#tpu.dimension_semantics<parallel>], iteration_bounds = array<i64: 1>, scalar_prefetch = 0 : i64, scratch_operands = 0 : i64, tpu.core_type = #tpu.core_type<tc>, window_params = [{pipeline_mode = #tpu.pipeline_mode<synchronous>, transform_indices = @transform_0, window_bounds = array<i64: 64, 256>}, {transform_indices = @transform_1, window_bounds = array<i64: 256, 128>}, {transform_indices = @transform_2, window_bounds = array<i64: 1, 128>}, {transform_indices = @transform_3, window_bounds = array<i64: 1, 128>}, {transform_indices = @transform_4, window_bounds = array<i64: 64, 128>}]} {
    %c0 = arith.constant 0 : index
    %c0_0 = arith.constant 0 : index
    %0 = vector.load %arg1[%c0, %c0_0] : memref<64x256xbf16, #tpu.memory_space<vmem>>, vector<64x256xbf16>
    %c0_1 = arith.constant 0 : index
    %c0_2 = arith.constant 0 : index
    %1 = vector.load %arg2[%c0_1, %c0_2] : memref<256x128xbf16, #tpu.memory_space<vmem>>, vector<256x128xbf16>
    %cst = arith.constant dense<0.000000e+00> : vector<64x128xf32>
    %2 = tpu.matmul %0, %1, %cst {dimension_numbers = #tpu.dot_dimension_numbers<[1], [0], [0], [1], [0, 0, 1, 1], [], []>} : vector<64x256xbf16>, vector<256x128xbf16>, vector<64x128xf32> -> vector<64x128xf32>
    %cst_3 = arith.constant dense<0.000000e+00> : vector<128xf32>
    %3 = vector.multi_reduction <add>, %2, %cst_3 [0] : vector<64x128xf32> to vector<128xf32>
    %4 = vector.shape_cast %3 : vector<128xf32> to vector<1x128xf32>
    %cst_4 = arith.constant 1.562500e-02 : f32
    %5 = vector.broadcast %cst_4 : f32 to vector<1x128xf32>
    %6 = arith.mulf %4, %5 : vector<1x128xf32>
    %7 = arith.mulf %2, %2 : vector<64x128xf32>
    %cst_5 = arith.constant dense<0.000000e+00> : vector<128xf32>
    %8 = vector.multi_reduction <add>, %7, %cst_5 [0] : vector<64x128xf32> to vector<128xf32>
    %9 = vector.shape_cast %8 : vector<128xf32> to vector<1x128xf32>
    %cst_6 = arith.constant 1.562500e-02 : f32
    %10 = vector.broadcast %cst_6 : f32 to vector<1x128xf32>
    %11 = arith.mulf %9, %10 : vector<1x128xf32>
    %12 = arith.mulf %6, %6 : vector<1x128xf32>
    %13 = arith.subf %11, %12 : vector<1x128xf32>
    %cst_7 = arith.constant 0.000000e+00 : f32
    %14 = vector.broadcast %cst_7 : f32 to vector<1x128xf32>
    %15 = arith.maximumf %13, %14 : vector<1x128xf32>
    %16 = vector.broadcast %6 : vector<1x128xf32> to vector<64x128xf32>
    %17 = arith.subf %2, %16 : vector<64x128xf32>
    %cst_8 = arith.constant 9.99999974E-6 : f32
    %18 = vector.broadcast %cst_8 : f32 to vector<1x128xf32>
    %19 = arith.addf %15, %18 : vector<1x128xf32>
    %20 = math.rsqrt %19 : vector<1x128xf32>
    %21 = vector.broadcast %20 : vector<1x128xf32> to vector<64x128xf32>
    %22 = arith.mulf %17, %21 : vector<64x128xf32>
    %c0_9 = arith.constant 0 : index
    %c0_10 = arith.constant 0 : index
    %23 = vector.load %arg3[%c0_9, %c0_10] : memref<1x128xf32, #tpu.memory_space<vmem>>, vector<1x128xf32>
    %24 = vector.broadcast %23 : vector<1x128xf32> to vector<64x128xf32>
    %25 = arith.mulf %22, %24 : vector<64x128xf32>
    %c0_11 = arith.constant 0 : index
    %c0_12 = arith.constant 0 : index
    %26 = vector.load %arg4[%c0_11, %c0_12] : memref<1x128xf32, #tpu.memory_space<vmem>>, vector<1x128xf32>
    %27 = vector.broadcast %26 : vector<1x128xf32> to vector<64x128xf32>
    %28 = arith.addf %25, %27 : vector<64x128xf32>
    %cst_13 = arith.constant 0.000000e+00 : f32
    %29 = vector.broadcast %cst_13 : f32 to vector<64x128xf32>
    %30 = arith.maximumf %28, %29 : vector<64x128xf32>
    %c0_14 = arith.constant 0 : index
    %c0_15 = arith.constant 0 : index
    %31 = vector.load %arg5[%c0_14, %c0_15] : memref<64x128xf32, #tpu.memory_space<vmem>>, vector<64x128xf32>
    tpu.vector_store %arg5[%c0_14, %c0_15], %30 {strides = array<i32>} : memref<64x128xf32, #tpu.memory_space<vmem>>, vector<64x128xf32>,
    return
  }
  func.func @transform_0(%arg0: i32) -> (i32, i32) {
    %c0_i32 = arith.constant 0 : i32
    %c0_i32_0 = arith.constant 0 : i32
    %c0_i32_1 = arith.constant 0 : i32
    return %c0_i32, %c0_i32_0 : i32, i32
  }
  func.func @transform_1(%arg0: i32) -> (i32, i32) {
    %c0_i32 = arith.constant 0 : i32
    %c0_i32_0 = arith.constant 0 : i32
    return %c0_i32, %arg0 : i32, i32
  }
  func.func @transform_2(%arg0: i32) -> (i32, i32) {
    %c0_i32 = arith.constant 0 : i32
    %c0_i32_0 = arith.constant 0 : i32
    return %c0_i32, %arg0 : i32, i32
  }
  func.func @transform_3(%arg0: i32) -> (i32, i32) {
    %c0_i32 = arith.constant 0 : i32
    %c0_i32_0 = arith.constant 0 : i32
    return %c0_i32, %arg0 : i32, i32
  }
  func.func @transform_4(%arg0: i32) -> (i32, i32) {
    %c0_i32 = arith.constant 0 : i32
    %c0_i32_0 = arith.constant 0 : i32
    return %c0_i32, %arg0 : i32, i32
  }
}

module attributes {stable_mosaic.version = 11 : i64} {
  func.func @_fused_small_kernel(%arg0: i32, %arg1: memref<16x128xbf16, #tpu.memory_space<vmem>>, %arg2: memref<128x256xbf16, #tpu.memory_space<vmem>>, %arg3: memref<1x256xf32, #tpu.memory_space<vmem>>, %arg4: memref<1x256xf32, #tpu.memory_space<vmem>>, %arg5: memref<16x256xf32, #tpu.memory_space<vmem>>) attributes {dimension_semantics = [#tpu.dimension_semantics<parallel>], iteration_bounds = array<i64: 1>, scalar_prefetch = 0 : i64, scratch_operands = 0 : i64, tpu.core_type = #tpu.core_type<tc>, window_params = [{pipeline_mode = #tpu.pipeline_mode<synchronous>, transform_indices = @transform_0, window_bounds = array<i64: 16, 128>}, {transform_indices = @transform_1, window_bounds = array<i64: 128, 256>}, {transform_indices = @transform_2, window_bounds = array<i64: 1, 256>}, {transform_indices = @transform_3, window_bounds = array<i64: 1, 256>}, {transform_indices = @transform_4, window_bounds = array<i64: 16, 256>}]} {
    %c0 = arith.constant 0 : index
    %c0_0 = arith.constant 0 : index
    %0 = vector.load %arg1[%c0, %c0_0] : memref<16x128xbf16, #tpu.memory_space<vmem>>, vector<16x128xbf16>
    %c0_1 = arith.constant 0 : index
    %c0_2 = arith.constant 0 : index
    %1 = vector.load %arg2[%c0_1, %c0_2] : memref<128x256xbf16, #tpu.memory_space<vmem>>, vector<128x256xbf16>
    %cst = arith.constant dense<0.000000e+00> : vector<16x256xf32>
    %2 = tpu.matmul %0, %1, %cst {dimension_numbers = #tpu.dot_dimension_numbers<[1], [0], [0], [1], [0, 0, 1, 1], [], []>} : vector<16x128xbf16>, vector<128x256xbf16>, vector<16x256xf32> -> vector<16x256xf32>
    %cst_3 = arith.constant dense<0.000000e+00> : vector<256xf32>
    %3 = vector.multi_reduction <add>, %2, %cst_3 [0] : vector<16x256xf32> to vector<256xf32>
    %4 = vector.shape_cast %3 : vector<256xf32> to vector<1x256xf32>
    %cst_4 = arith.constant 6.250000e-02 : f32
    %5 = vector.broadcast %cst_4 : f32 to vector<1x256xf32>
    %6 = arith.mulf %4, %5 : vector<1x256xf32>
    %7 = arith.mulf %2, %2 : vector<16x256xf32>
    %cst_5 = arith.constant dense<0.000000e+00> : vector<256xf32>
    %8 = vector.multi_reduction <add>, %7, %cst_5 [0] : vector<16x256xf32> to vector<256xf32>
    %9 = vector.shape_cast %8 : vector<256xf32> to vector<1x256xf32>
    %cst_6 = arith.constant 6.250000e-02 : f32
    %10 = vector.broadcast %cst_6 : f32 to vector<1x256xf32>
    %11 = arith.mulf %9, %10 : vector<1x256xf32>
    %12 = arith.mulf %6, %6 : vector<1x256xf32>
    %13 = arith.subf %11, %12 : vector<1x256xf32>
    %cst_7 = arith.constant 0.000000e+00 : f32
    %14 = vector.broadcast %cst_7 : f32 to vector<1x256xf32>
    %15 = arith.maximumf %13, %14 : vector<1x256xf32>
    %16 = vector.broadcast %6 : vector<1x256xf32> to vector<16x256xf32>
    %17 = arith.subf %2, %16 : vector<16x256xf32>
    %cst_8 = arith.constant 9.99999974E-6 : f32
    %18 = vector.broadcast %cst_8 : f32 to vector<1x256xf32>
    %19 = arith.addf %15, %18 : vector<1x256xf32>
    %20 = math.rsqrt %19 : vector<1x256xf32>
    %21 = vector.broadcast %20 : vector<1x256xf32> to vector<16x256xf32>
    %22 = arith.mulf %17, %21 : vector<16x256xf32>
    %c0_9 = arith.constant 0 : index
    %c0_10 = arith.constant 0 : index
    %23 = vector.load %arg3[%c0_9, %c0_10] : memref<1x256xf32, #tpu.memory_space<vmem>>, vector<1x256xf32>
    %24 = vector.broadcast %23 : vector<1x256xf32> to vector<16x256xf32>
    %25 = arith.mulf %22, %24 : vector<16x256xf32>
    %c0_11 = arith.constant 0 : index
    %c0_12 = arith.constant 0 : index
    %26 = vector.load %arg4[%c0_11, %c0_12] : memref<1x256xf32, #tpu.memory_space<vmem>>, vector<1x256xf32>
    %27 = vector.broadcast %26 : vector<1x256xf32> to vector<16x256xf32>
    %28 = arith.addf %25, %27 : vector<16x256xf32>
    %cst_13 = arith.constant 0.000000e+00 : f32
    %29 = vector.broadcast %cst_13 : f32 to vector<16x256xf32>
    %30 = arith.maximumf %28, %29 : vector<16x256xf32>
    %c0_14 = arith.constant 0 : index
    %c0_15 = arith.constant 0 : index
    %31 = vector.load %arg5[%c0_14, %c0_15] : memref<16x256xf32, #tpu.memory_space<vmem>>, vector<16x256xf32>
    tpu.vector_store %arg5[%c0_14, %c0_15], %30 {strides = array<i32>} : memref<16x256xf32, #tpu.memory_space<vmem>>, vector<16x256xf32>,
    return
  }
  func.func @transform_0(%arg0: i32) -> (i32, i32) {
    %c0_i32 = arith.constant 0 : i32
    %c0_i32_0 = arith.constant 0 : i32
    %c0_i32_1 = arith.constant 0 : i32
    return %c0_i32, %c0_i32_0 : i32, i32
  }
  func.func @transform_1(%arg0: i32) -> (i32, i32) {
    %c0_i32 = arith.constant 0 : i32
    %c0_i32_0 = arith.constant 0 : i32
    return %c0_i32, %arg0 : i32, i32
  }
  func.func @transform_2(%arg0: i32) -> (i32, i32) {
    %c0_i32 = arith.constant 0 : i32
    %c0_i32_0 = arith.constant 0 : i32
    return %c0_i32, %arg0 : i32, i32
  }
  func.func @transform_3(%arg0: i32) -> (i32, i32) {
    %c0_i32 = arith.constant 0 : i32
    %c0_i32_0 = arith.constant 0 : i32
    return %c0_i32, %arg0 : i32, i32
  }
  func.func @transform_4(%arg0: i32) -> (i32, i32) {
    %c0_i32 = arith.constant 0 : i32
    %c0_i32_0 = arith.constant 0 : i32
    return %c0_i32, %arg0 : i32, i32
  }
}

module attributes {stable_mosaic.version = 11 : i64} {
  func.func @_fused_small_kernel(%arg0: i32, %arg1: memref<16x256xbf16, #tpu.memory_space<vmem>>, %arg2: memref<256x128xbf16, #tpu.memory_space<vmem>>, %arg3: memref<1x128xf32, #tpu.memory_space<vmem>>, %arg4: memref<1x128xf32, #tpu.memory_space<vmem>>, %arg5: memref<16x128xf32, #tpu.memory_space<vmem>>) attributes {dimension_semantics = [#tpu.dimension_semantics<parallel>], iteration_bounds = array<i64: 7>, scalar_prefetch = 0 : i64, scratch_operands = 0 : i64, tpu.core_type = #tpu.core_type<tc>, window_params = [{pipeline_mode = #tpu.pipeline_mode<synchronous>, transform_indices = @transform_0, window_bounds = array<i64: 16, 256>}, {transform_indices = @transform_1, window_bounds = array<i64: 256, 128>}, {transform_indices = @transform_2, window_bounds = array<i64: 1, 128>}, {transform_indices = @transform_3, window_bounds = array<i64: 1, 128>}, {transform_indices = @transform_4, window_bounds = array<i64: 16, 128>}]} {
    %c0 = arith.constant 0 : index
    %c0_0 = arith.constant 0 : index
    %0 = vector.load %arg1[%c0, %c0_0] : memref<16x256xbf16, #tpu.memory_space<vmem>>, vector<16x256xbf16>
    %c0_1 = arith.constant 0 : index
    %c0_2 = arith.constant 0 : index
    %1 = vector.load %arg2[%c0_1, %c0_2] : memref<256x128xbf16, #tpu.memory_space<vmem>>, vector<256x128xbf16>
    %cst = arith.constant dense<0.000000e+00> : vector<16x128xf32>
    %2 = tpu.matmul %0, %1, %cst {dimension_numbers = #tpu.dot_dimension_numbers<[1], [0], [0], [1], [0, 0, 1, 1], [], []>} : vector<16x256xbf16>, vector<256x128xbf16>, vector<16x128xf32> -> vector<16x128xf32>
    %cst_3 = arith.constant dense<0.000000e+00> : vector<128xf32>
    %3 = vector.multi_reduction <add>, %2, %cst_3 [0] : vector<16x128xf32> to vector<128xf32>
    %4 = vector.shape_cast %3 : vector<128xf32> to vector<1x128xf32>
    %cst_4 = arith.constant 6.250000e-02 : f32
    %5 = vector.broadcast %cst_4 : f32 to vector<1x128xf32>
    %6 = arith.mulf %4, %5 : vector<1x128xf32>
    %7 = arith.mulf %2, %2 : vector<16x128xf32>
    %cst_5 = arith.constant dense<0.000000e+00> : vector<128xf32>
    %8 = vector.multi_reduction <add>, %7, %cst_5 [0] : vector<16x128xf32> to vector<128xf32>
    %9 = vector.shape_cast %8 : vector<128xf32> to vector<1x128xf32>
    %cst_6 = arith.constant 6.250000e-02 : f32
    %10 = vector.broadcast %cst_6 : f32 to vector<1x128xf32>
    %11 = arith.mulf %9, %10 : vector<1x128xf32>
    %12 = arith.mulf %6, %6 : vector<1x128xf32>
    %13 = arith.subf %11, %12 : vector<1x128xf32>
    %cst_7 = arith.constant 0.000000e+00 : f32
    %14 = vector.broadcast %cst_7 : f32 to vector<1x128xf32>
    %15 = arith.maximumf %13, %14 : vector<1x128xf32>
    %16 = vector.broadcast %6 : vector<1x128xf32> to vector<16x128xf32>
    %17 = arith.subf %2, %16 : vector<16x128xf32>
    %cst_8 = arith.constant 9.99999974E-6 : f32
    %18 = vector.broadcast %cst_8 : f32 to vector<1x128xf32>
    %19 = arith.addf %15, %18 : vector<1x128xf32>
    %20 = math.rsqrt %19 : vector<1x128xf32>
    %21 = vector.broadcast %20 : vector<1x128xf32> to vector<16x128xf32>
    %22 = arith.mulf %17, %21 : vector<16x128xf32>
    %c0_9 = arith.constant 0 : index
    %c0_10 = arith.constant 0 : index
    %23 = vector.load %arg3[%c0_9, %c0_10] : memref<1x128xf32, #tpu.memory_space<vmem>>, vector<1x128xf32>
    %24 = vector.broadcast %23 : vector<1x128xf32> to vector<16x128xf32>
    %25 = arith.mulf %22, %24 : vector<16x128xf32>
    %c0_11 = arith.constant 0 : index
    %c0_12 = arith.constant 0 : index
    %26 = vector.load %arg4[%c0_11, %c0_12] : memref<1x128xf32, #tpu.memory_space<vmem>>, vector<1x128xf32>
    %27 = vector.broadcast %26 : vector<1x128xf32> to vector<16x128xf32>
    %28 = arith.addf %25, %27 : vector<16x128xf32>
    %c0_13 = arith.constant 0 : index
    %c0_14 = arith.constant 0 : index
    %29 = vector.load %arg5[%c0_13, %c0_14] : memref<16x128xf32, #tpu.memory_space<vmem>>, vector<16x128xf32>
    tpu.vector_store %arg5[%c0_13, %c0_14], %28 {strides = array<i32>} : memref<16x128xf32, #tpu.memory_space<vmem>>, vector<16x128xf32>,
    return
  }
  func.func @transform_0(%arg0: i32) -> (i32, i32) {
    %c0_i32 = arith.constant 0 : i32
    %c0_i32_0 = arith.constant 0 : i32
    %c0_i32_1 = arith.constant 0 : i32
    return %c0_i32, %c0_i32_0 : i32, i32
  }
  func.func @transform_1(%arg0: i32) -> (i32, i32) {
    %c0_i32 = arith.constant 0 : i32
    %c0_i32_0 = arith.constant 0 : i32
    return %c0_i32, %arg0 : i32, i32
  }
  func.func @transform_2(%arg0: i32) -> (i32, i32) {
    %c0_i32 = arith.constant 0 : i32
    %c0_i32_0 = arith.constant 0 : i32
    return %c0_i32, %arg0 : i32, i32
  }
  func.func @transform_3(%arg0: i32) -> (i32, i32) {
    %c0_i32 = arith.constant 0 : i32
    %c0_i32_0 = arith.constant 0 : i32
    return %c0_i32, %arg0 : i32, i32
  }
  func.func @transform_4(%arg0: i32) -> (i32, i32) {
    %c0_i32 = arith.constant 0 : i32
    %c0_i32_0 = arith.constant 0 : i32
    return %c0_i32, %arg0 : i32, i32
  }
}

</mosaic_0001>

<llo_original>
// kernel: _lambda_.5
$region0: #{_lambda_.5}
  #allocation0 [shape = 'u32[]', space=smem, size = 0x4, offset = 0x4, fixed_abs, tag = 'smem constant byte address 0x4 - core index']
  #allocation1 [shape = 'u32[144,128]{1,0:T(1,128)}', space=vmem, size = 0x12000, scoped, tag = 'internal scratch']
  %s0 = inlined_call_operand.vmem [shape: bf16[640,256], index: 0, kind: input, shape index: {}]
  %s1 = inlined_call_operand.vmem [shape: bf16[256,128], index: 1, kind: input, shape index: {}]
  %s2 = inlined_call_operand.vmem [shape: f32[640,128], index: 2, kind: output, shape index: {0}]
  %s3 = inlined_call_operand.vmem [shape: f32[1,128], index: 3, kind: output, shape index: {1}]
  %s4 = inlined_call_operand.vmem [shape: f32[1,128], index: 4, kind: output, shape index: {2}]
  %5 = xla_tuple %s2, %s3, %s4
  %s6 = sld [smem:[#allocation0]]
  $region61: #{_lambda_.5} parent=0
    _
  %s8 = ssub.s32 1, %s6
  %s9 = scalar_select 0, %s8, %s6
  loop: start=0, step=1, limit=7
  $region2: #{_lambda_.5} parent=0 // loop_pre_header
    _
  $region3: #{_lambda_.5} parent=0 // loop_header
    %s11 = sphi 0, %s15
    %p12 = scmp.ge.s32.totalorder %s11, 7
    %s18 = sphi 0, %s30
    %s19 = sphi 0, %s26
    %s20 = sphi 0, %s18
    %s21 = sphi 0, %s19
    %s22 = sphi 0, %s20
    %s23 = sphi 0, %s21
    %s33 = sphi 0, %s35
    %s36 = sphi 0, %s33
    %s37 = sphi 0, %s36
    %s53 = sphi 0, %s37
    %s59 = sphi 0, %s61
    %s62 = sphi 0, %s59
    %s63 = sphi 0, %s62
    %s79 = sphi 0, %s63
    %s87 = sphi 0, %s89
    %s90 = sphi 0, %s87
    %s91 = sphi 0, %s90
    %s107 = sphi 0, %s91
    %s113 = sphi 0, %s115
    %s116 = sphi 0, %s113
    %s117 = sphi 0, %s116
    %s133 = sphi 0, %s117
    %s139 = sphi 0, %s141
    %s142 = sphi 0, %s139
    %s143 = sphi 0, %s142
    %s159 = sphi 0, %s143
  $region4: #{_lambda_.5} parent=0 // loop_header_branch
    %14 = sbr.rel (%p12) target = $region8
  $region5: #{_lambda_.5} parent=0 // loop_body
    %s16 = ssub.s32 %s11, 1
    %s17 = ssub.s32 %s11, 2
    %s24 = sadd.s32 1, %s19
    %p25 = scmp.ge.s32.totalorder %s24, 5
    %s26 = scalar_select %p25, 0, %s24
    %s27 = sadd.s32 1, %s18
    %s28 = scalar_select %p25, %s27, %s18
    %p29 = scmp.ge.s32.totalorder %s28, 1
    %s30 = scalar_select %p29, 0, %s28
    %s31 = ssub.s32 %s19, %s26
    %p32 = scmp.eq.s32.totalorder %s31, 0
    %s34 = sadd.s32 %s33, 1
    %s35 = scalar_select %p32, %s33, %s34
    %p38 = pneg %p32
    %p39 = scmp.eq.s32.totalorder %s11, 4
    %p40 = por %p38, %p39
    %p41 = scmp.ne.s32.totalorder %s33, %s36
    %p42 = scmp.eq.s32.totalorder %s11, 0
    %p43 = por %p41, %p42
    %p44 = scmp.ne.s32.totalorder %s33, %s36
    %p45 = scmp.eq.s32.totalorder %s16, 4
    %p46 = por %p44, %p45
    %p47 = scmp.ne.s32.totalorder %s36, %s37
    %p48 = scmp.eq.s32.totalorder %s16, 0
    %p49 = por %p47, %p48
    %p50 = scmp.ne.s32.totalorder %s36, %s37
    %p51 = scmp.eq.s32.totalorder %s17, 4
    %p52 = por %p50, %p51
    %p54 = scmp.ne.s32.totalorder %s37, %s53
    %p55 = scmp.eq.s32.totalorder %s17, 0
    %p56 = por %p54, %p55
    %s57 = ssub.s32 %s18, %s30
    %p58 = scmp.eq.s32.totalorder %s57, 0
    %s60 = sadd.s32 %s59, 1
    %s61 = scalar_select %p58, %s59, %s60
    %p64 = pneg %p58
    %p65 = scmp.eq.s32.totalorder %s11, 4
    %p66 = por %p64, %p65
    %p67 = scmp.ne.s32.totalorder %s59, %s62
    %p68 = scmp.eq.s32.totalorder %s11, 0
    %p69 = por %p67, %p68
    %p70 = scmp.ne.s32.totalorder %s59, %s62
    %p71 = scmp.eq.s32.totalorder %s16, 4
    %p72 = por %p70, %p71
    %p73 = scmp.ne.s32.totalorder %s62, %s63
    %p74 = scmp.eq.s32.totalorder %s16, 0
    %p75 = por %p73, %p74
    %p76 = scmp.ne.s32.totalorder %s62, %s63
    %p77 = scmp.eq.s32.totalorder %s17, 4
    %p78 = por %p76, %p77
    %p80 = scmp.ne.s32.totalorder %s63, %s79
    %p81 = scmp.eq.s32.totalorder %s17, 0
    %p82 = por %p80, %p81
    %s83 = ssub.s32 %s19, %s26
    %s84 = ssub.s32 %s18, %s30
    %s85 = sor.u32 %s83, %s84
    %p86 = scmp.eq.s32.totalorder %s85, 0
    %s88 = sadd.s32 %s87, 1
    %s89 = scalar_select %p86, %s87, %s88
    %p92 = pneg %p86
    %p93 = scmp.eq.s32.totalorder %s11, 4
    %p94 = por %p92, %p93
    %p95 = scmp.ne.s32.totalorder %s87, %s90
    %p96 = scmp.eq.s32.totalorder %s11, 0
    %p97 = por %p95, %p96
    %p98 = scmp.ne.s32.totalorder %s87, %s90
    %p99 = scmp.eq.s32.totalorder %s16, 4
    %p100 = por %p98, %p99
    %p101 = scmp.ne.s32.totalorder %s90, %s91
    %p102 = scmp.eq.s32.totalorder %s16, 0
    %p103 = por %p101, %p102
    %p104 = scmp.ne.s32.totalorder %s90, %s91
    %p105 = scmp.eq.s32.totalorder %s17, 4
    %p106 = por %p104, %p105
    %p108 = scmp.ne.s32.totalorder %s91, %s107
    %p109 = scmp.eq.s32.totalorder %s17, 0
    %p110 = por %p108, %p109
    %s111 = ssub.s32 %s18, %s30
    %p112 = scmp.eq.s32.totalorder %s111, 0
    %s114 = sadd.s32 %s113, 1
    %s115 = scalar_select %p112, %s113, %s114
    %p118 = pneg %p112
    %p119 = scmp.eq.s32.totalorder %s11, 4
    %p120 = por %p118, %p119
    %p121 = scmp.ne.s32.totalorder %s113, %s116
    %p122 = scmp.eq.s32.totalorder %s11, 0
    %p123 = por %p121, %p122
    %p124 = scmp.ne.s32.totalorder %s113, %s116
    %p125 = scmp.eq.s32.totalorder %s16, 4
    %p126 = por %p124, %p125
    %p127 = scmp.ne.s32.totalorder %s116, %s117
    %p128 = scmp.eq.s32.totalorder %s16, 0
    %p129 = por %p127, %p128
    %p130 = scmp.ne.s32.totalorder %s116, %s117
    %p131 = scmp.eq.s32.totalorder %s17, 4
    %p132 = por %p130, %p131
    %p134 = scmp.ne.s32.totalorder %s117, %s133
    %p135 = scmp.eq.s32.totalorder %s17, 0
    %p136 = por %p134, %p135
    %s137 = ssub.s32 %s18, %s30
    %p138 = scmp.eq.s32.totalorder %s137, 0
    %s140 = sadd.s32 %s139, 1
    %s141 = scalar_select %p138, %s139, %s140
    %p144 = pneg %p138
    %p145 = scmp.eq.s32.totalorder %s11, 4
    %p146 = por %p144, %p145
    %p147 = scmp.ne.s32.totalorder %s139, %s142
    %p148 = scmp.eq.s32.totalorder %s11, 0
    %p149 = por %p147, %p148
    %p150 = scmp.ne.s32.totalorder %s139, %s142
    %p151 = scmp.eq.s32.totalorder %s16, 4
    %p152 = por %p150, %p151
    %p153 = scmp.ne.s32.totalorder %s142, %s143
    %p154 = scmp.eq.s32.totalorder %s16, 0
    %p155 = por %p153, %p154
    %p156 = scmp.ne.s32.totalorder %s142, %s143
    %p157 = scmp.eq.s32.totalorder %s17, 4
    %p158 = por %p156, %p157
    %p160 = scmp.ne.s32.totalorder %s143, %s159
    %p161 = scmp.eq.s32.totalorder %s17, 0
    %p162 = por %p160, %p161
    %p163 = scmp.le.s32.totalorder 1, %s11
    %p164 = scmp.lt.s32.totalorder %s11, 6
    %p165 = pnand %p163, %p164
    %p166 = pneg %p165
    // Predicated region
    $region9: #{_lambda_.5} parent=5 // pred_check
      _
    $region10: #{_lambda_.5} parent=5 // pred_check_branch
      %168 = sbr.rel (%p165) target = $region12
    $region11: #{_lambda_.5} parent=5 // pred_region
      %s169 = ssub.s32 %s11, 1
      // Predicated region
      $region13: #{_lambda_.5} parent=11 // pred_check
        %p170 = pneg %p75
      $region14: #{_lambda_.5} parent=11 // pred_check_branch
        %172 = sbr.rel (%p170) target = $region16
      $region15: #{_lambda_.5} parent=11 // pred_region
        %p173 = scmp.lt.s32.totalorder %s20, 0
        %s174 = scalar_select %p173, %s20, 0
        %s175 = smul.addr %s174, 4
        %s176 = scalar_lea.vmem %s1, %s175
      $region16: #{_lambda_.5} parent=11 // pred_fallthru
        _
    $region12: #{_lambda_.5} parent=5 // pred_fallthru
      _
    %p177 = scmp.lt.s32.totalorder %s11, 5
    // Predicated region
    $region17: #{_lambda_.5} parent=5 // pred_check
      %p178 = pneg %p177
    $region18: #{_lambda_.5} parent=5 // pred_check_branch
      %180 = sbr.rel (%p178) target = $region20
    $region19: #{_lambda_.5} parent=5 // pred_region
      // Predicated region
      $region21: #{_lambda_.5} parent=19 // pred_check
        %p181 = pneg %p43
      $region22: #{_lambda_.5} parent=19 // pred_check_branch
        %183 = sbr.rel (%p181) target = $region24
      $region23: #{_lambda_.5} parent=19 // pred_region
        %s184 = smul.u32 16, %s19
        %p185 = scmp.lt.s32.totalorder %s184, 79
        %s186 = scalar_select %p185, %s184, 79
        %s187 = smul.addr %s186, 2
        %s188 = smul.addr %s187, 4
        %s189 = scalar_lea.vmem %s0, %s188
        %s190 = smul.u32 16, %s19
      $region24: #{_lambda_.5} parent=19 // pred_fallthru
        _
    $region20: #{_lambda_.5} parent=5 // pred_fallthru
      _
    %p191 = scmp.le.s32.totalorder 1, %s11
    %p192 = scmp.lt.s32.totalorder %s11, 6
    %p193 = pnand %p191, %p192
    %p194 = pneg %p193
    // Predicated region
    $region25: #{_lambda_.5} parent=5 // pred_check
      _
    $region26: #{_lambda_.5} parent=5 // pred_check_branch
      %196 = sbr.rel (%p193) target = $region28
    $region27: #{_lambda_.5} parent=5 // pred_region
      %s197 = ssub.s32 %s11, 1
      %s198 = smul.u32 16, %s21
      %p199 = scmp.lt.s32.totalorder %s198, 79
      %s200 = scalar_select %p199, %s198, 79
      %s201 = smul.addr %s200, 2
      %s202 = smul.addr %s201, 4
      %s203 = scalar_lea.vmem %s0, %s202
      %p204 = pneg %p49
      %p205 = pneg %p46
      %p206 = scmp.lt.s32.totalorder %s20, 0
      %s207 = scalar_select %p206, %s20, 0
      %s208 = smul.addr %s207, 4
      %s209 = scalar_lea.vmem %s1, %s208
      %p210 = pneg %p75
      %p211 = pneg %p72
      %p212 = pneg %p103
      %p213 = pneg %p100
      %s214 = smul.u32 16, %s21
      %p215 = scmp.lt.s32.totalorder %s214, 79
      %s216 = scalar_select %p215, %s214, 79
      %p217 = scmp.lt.s32.totalorder %s20, 0
      %s218 = scalar_select %p217, %s20, 0
      %s219 = sadd.s32 %s218, %s216
      %s220 = smul.addr %s219, 8
      %s221 = scalar_lea.vmem %s2, %s220
      %p222 = pneg %p129
      %p223 = pneg %p126
      %p224 = scmp.lt.s32.totalorder %s20, 0
      %s225 = scalar_select %p224, %s20, 0
      %s226 = scalar_lea.vmem %s3, %s225
      %p227 = pneg %p155
      %p228 = pneg %p152
      %p229 = scmp.lt.s32.totalorder %s20, 0
      %s230 = scalar_select %p229, %s20, 0
      %s231 = scalar_lea.vmem %s4, %s230
      %s232 = smul.u32 16, %s21
      %p233 = scmp.lt.s32.totalorder %s232, 79
      %s234 = scalar_select %p233, %s232, 79
      %s235 = smul.addr %s234, 2
      %s236 = smul.addr %s235, 4
      %s237 = scalar_lea.vmem %s0, %s236
      %s238 = smul.u32 16, %s21
      %p239 = scmp.lt.s32.totalorder %s20, 0
      %s240 = scalar_select %p239, %s20, 0
      %s241 = smul.addr %s240, 4
      %s242 = scalar_lea.vmem %s1, %s241
      %s243 = smul.u32 16, %s21
      %p244 = scmp.lt.s32.totalorder %s243, 79
      %s245 = scalar_select %p244, %s243, 79
      %p246 = scmp.lt.s32.totalorder %s20, 0
      %s247 = scalar_select %p246, %s20, 0
      %s248 = sadd.s32 %s247, %s245
      %s249 = smul.addr %s248, 8
      %s250 = scalar_lea.vmem %s2, %s249
      %s251 = smul.u32 16, %s21
      %p252 = scmp.lt.s32.totalorder %s20, 0
      %s253 = scalar_select %p252, %s20, 0
      %s254 = scalar_lea.vmem %s3, %s253
      %p255 = scmp.lt.s32.totalorder %s20, 0
      %s256 = scalar_select %p255, %s20, 0
      %s257 = scalar_lea.vmem %s4, %s256
      %p259 = scmp.eq.s32.totalorder %s21, 0
      // Predicated region
      $region29: #{_lambda_.5} parent=27 // pred_check
        %p260 = pneg %p259
      $region30: #{_lambda_.5} parent=27 // pred_check_branch
        %262 = sbr.rel (%p260) target = $region32
      $region31: #{_lambda_.5} parent=27 // pred_region
        %263 = vst [vmem:[%s254] sm:$0x1] 0.0
        %264 = vst [vmem:[%s257] sm:$0x1] 0.0
      $region32: #{_lambda_.5} parent=27 // pred_fallthru
        _
      %v265 = vld [vmem:[%s237] sm:$0xff]
      %v266 = vld [vmem:[%s237 + $0x8] sm:$0xff]
      %v267 = vld [vmem:[%s237 + $0x10] sm:$0xff]
      %v268 = vld [vmem:[%s237 + $0x18] sm:$0xff]
      %v269 = vld [vmem:[%s237 + $0x20] sm:$0xff]
      %v270 = vld [vmem:[%s237 + $0x28] sm:$0xff]
      %v271 = vld [vmem:[%s237 + $0x30] sm:$0xff]
      %v272 = vld [vmem:[%s237 + $0x38] sm:$0xff]
      %v273 = vld [vmem:[%s237 + $0x40] sm:$0xff]
      %v274 = vld [vmem:[%s237 + $0x48] sm:$0xff]
      %v275 = vld [vmem:[%s237 + $0x50] sm:$0xff]
      %v276 = vld [vmem:[%s237 + $0x58] sm:$0xff]
      %v277 = vld [vmem:[%s237 + $0x60] sm:$0xff]
      %v278 = vld [vmem:[%s237 + $0x68] sm:$0xff]
      %v279 = vld [vmem:[%s237 + $0x70] sm:$0xff]
      %v280 = vld [vmem:[%s237 + $0x78] sm:$0xff]
      %v281 = vld [vmem:[%s242] sm:$0xf]
      %v282 = vld [vmem:[%s242 + $0x4] sm:$0xf]
      %v283 = vld [vmem:[%s242 + $0x8] sm:$0xf]
      %v284 = vld [vmem:[%s242 + $0xc] sm:$0xf]
      %v285 = vld [vmem:[%s242 + $0x10] sm:$0xf]
      %v286 = vld [vmem:[%s242 + $0x14] sm:$0xf]
      %v287 = vld [vmem:[%s242 + $0x18] sm:$0xf]
      %v288 = vld [vmem:[%s242 + $0x1c] sm:$0xf]
      %v289 = vld [vmem:[%s242 + $0x20] sm:$0xf]
      %v290 = vld [vmem:[%s242 + $0x24] sm:$0xf]
      %v291 = vld [vmem:[%s242 + $0x28] sm:$0xf]
      %v292 = vld [vmem:[%s242 + $0x2c] sm:$0xf]
      %v293 = vld [vmem:[%s242 + $0x30] sm:$0xf]
      %v294 = vld [vmem:[%s242 + $0x34] sm:$0xf]
      %v295 = vld [vmem:[%s242 + $0x38] sm:$0xf]
      %v296 = vld [vmem:[%s242 + $0x3c] sm:$0xf]
      %v297 = vld [vmem:[%s242 + $0x40] sm:$0xf]
      %v298 = vld [vmem:[%s242 + $0x44] sm:$0xf]
      %v299 = vld [vmem:[%s242 + $0x48] sm:$0xf]
      %v300 = vld [vmem:[%s242 + $0x4c] sm:$0xf]
      %v301 = vld [vmem:[%s242 + $0x50] sm:$0xf]
      %v302 = vld [vmem:[%s242 + $0x54] sm:$0xf]
      %v303 = vld [vmem:[%s242 + $0x58] sm:$0xf]
      %v304 = vld [vmem:[%s242 + $0x5c] sm:$0xf]
      %v305 = vld [vmem:[%s242 + $0x60] sm:$0xf]
      %v306 = vld [vmem:[%s242 + $0x64] sm:$0xf]
      %v307 = vld [vmem:[%s242 + $0x68] sm:$0xf]
      %v308 = vld [vmem:[%s242 + $0x6c] sm:$0xf]
      %v309 = vld [vmem:[%s242 + $0x70] sm:$0xf]
      %v310 = vld [vmem:[%s242 + $0x74] sm:$0xf]
      %v311 = vld [vmem:[%s242 + $0x78] sm:$0xf]
      %v312 = vld [vmem:[%s242 + $0x7c] sm:$0xf]
      %v329 = vunpack.c.l.b16 %v265
      %v330 = vunpack.c.h.b16 %v265
      %v331 = vunpack.c.l.b16 %v266
      %v332 = vunpack.c.h.b16 %v266
      %v333 = vunpack.c.l.b16 %v267
      %v334 = vunpack.c.h.b16 %v267
      %v335 = vunpack.c.l.b16 %v268
      %v336 = vunpack.c.h.b16 %v268
      %v337 = vunpack.c.l.b16 %v269
      %v338 = vunpack.c.h.b16 %v269
      %v339 = vunpack.c.l.b16 %v270
      %v340 = vunpack.c.h.b16 %v270
      %v341 = vunpack.c.l.b16 %v271
      %v342 = vunpack.c.h.b16 %v271
      %v343 = vunpack.c.l.b16 %v272
      %v344 = vunpack.c.h.b16 %v272
      %v345 = vunpack.c.l.b16 %v273
      %v346 = vunpack.c.h.b16 %v273
      %v347 = vunpack.c.l.b16 %v274
      %v348 = vunpack.c.h.b16 %v274
      %v349 = vunpack.c.l.b16 %v275
      %v350 = vunpack.c.h.b16 %v275
      %v351 = vunpack.c.l.b16 %v276
      %v352 = vunpack.c.h.b16 %v276
      %v353 = vunpack.c.l.b16 %v277
      %v354 = vunpack.c.h.b16 %v277
      %v355 = vunpack.c.l.b16 %v278
      %v356 = vunpack.c.h.b16 %v278
      %v357 = vunpack.c.l.b16 %v279
      %v358 = vunpack.c.h.b16 %v279
      %v359 = vunpack.c.l.b16 %v280
      %v360 = vunpack.c.h.b16 %v280
      %v361 = vpack.c.b16 %v331, %v329
      %v362 = vpack.c.b16 %v332, %v330
      %v363 = vpack.c.b16 %v335, %v333
      %v364 = vpack.c.b16 %v336, %v334
      %v365 = vpack.c.b16 %v339, %v337
      %v366 = vpack.c.b16 %v340, %v338
      %v367 = vpack.c.b16 %v343, %v341
      %v368 = vpack.c.b16 %v344, %v342
      %v369 = vpack.c.b16 %v347, %v345
      %v370 = vpack.c.b16 %v348, %v346
      %v371 = vpack.c.b16 %v351, %v349
      %v372 = vpack.c.b16 %v352, %v350
      %v373 = vpack.c.b16 %v355, %v353
      %v374 = vpack.c.b16 %v356, %v354
      %v375 = vpack.c.b16 %v359, %v357
      %v376 = vpack.c.b16 %v360, %v358
      %v425 = vunpack.c.l.b16 %v281
      %v426 = vunpack.c.l.b16 %v282
      %v427 = vunpack.c.l.b16 %v283
      %v428 = vunpack.c.l.b16 %v284
      %v429 = vunpack.c.l.b16 %v285
      %v430 = vunpack.c.l.b16 %v286
      %v431 = vunpack.c.l.b16 %v287
      %v432 = vunpack.c.l.b16 %v288
      %v433 = vunpack.c.l.b16 %v289
      %v434 = vunpack.c.l.b16 %v290
      %v435 = vunpack.c.l.b16 %v291
      %v436 = vunpack.c.l.b16 %v292
      %v437 = vunpack.c.l.b16 %v293
      %v438 = vunpack.c.l.b16 %v294
      %v439 = vunpack.c.l.b16 %v295
      %v440 = vunpack.c.l.b16 %v296
      %v441 = vunpack.c.l.b16 %v297
      %v442 = vunpack.c.l.b16 %v298
      %v443 = vunpack.c.l.b16 %v299
      %v444 = vunpack.c.l.b16 %v300
      %v445 = vunpack.c.l.b16 %v301
      %v446 = vunpack.c.l.b16 %v302
      %v447 = vunpack.c.l.b16 %v303
      %v448 = vunpack.c.l.b16 %v304
      %v449 = vunpack.c.l.b16 %v305
      %v450 = vunpack.c.l.b16 %v306
      %v451 = vunpack.c.l.b16 %v307
      %v452 = vunpack.c.l.b16 %v308
      %v453 = vunpack.c.l.b16 %v309
      %v454 = vunpack.c.l.b16 %v310
      %v455 = vunpack.c.l.b16 %v311
      %v456 = vunpack.c.l.b16 %v312
      %v457 = vpack.c.b16 %v426, %v425
      %v458 = vpack.c.b16 %v428, %v427
      %v459 = vpack.c.b16 %v430, %v429
      %v460 = vpack.c.b16 %v432, %v431
      %v461 = vpack.c.b16 %v434, %v433
      %v462 = vpack.c.b16 %v436, %v435
      %v463 = vpack.c.b16 %v438, %v437
      %v464 = vpack.c.b16 %v440, %v439
      %v465 = vpack.c.b16 %v442, %v441
      %v466 = vpack.c.b16 %v444, %v443
      %v467 = vpack.c.b16 %v446, %v445
      %v468 = vpack.c.b16 %v448, %v447
      %v469 = vpack.c.b16 %v450, %v449
      %v470 = vpack.c.b16 %v452, %v451
      %v471 = vpack.c.b16 %v454, %v453
      %v472 = vpack.c.b16 %v456, %v455
      %489 = vmatprep.subr.bf16.mxu0 0
      %490 = vmatpush1.bf16.msra.mxu0 %v457
      %491 = vmatprep.subr.bf16.mxu0 0
      %492 = vmatpush1.bf16.msra.mxu0 %v458
      %493 = vmatprep.subr.bf16.mxu0 0
      %494 = vmatpush1.bf16.msra.mxu0 %v459
      %495 = vmatprep.subr.bf16.mxu0 0
      %496 = vmatpush1.bf16.msra.mxu0 %v460
      %497 = vmatprep.subr.bf16.mxu0 0
      %498 = vmatpush1.bf16.msra.mxu0 %v461
      %499 = vmatprep.subr.bf16.mxu0 0
      %500 = vmatpush1.bf16.msra.mxu0 %v462
      %501 = vmatprep.subr.bf16.mxu0 0
      %502 = vmatpush1.bf16.msra.mxu0 %v463
      %503 = vmatprep.subr.bf16.mxu0 0
      %504 = vmatpush1.bf16.msra.mxu0 %v464
      %505 = vmatprep.subr.bf16.mxu0 0
      %506 = vmatpush1.bf16.msra.mxu0 %v465
      %507 = vmatprep.subr.bf16.mxu0 0
      %508 = vmatpush1.bf16.msra.mxu0 %v466
      %509 = vmatprep.subr.bf16.mxu0 0
      %510 = vmatpush1.bf16.msra.mxu0 %v467
      %511 = vmatprep.subr.bf16.mxu0 0
      %512 = vmatpush1.bf16.msra.mxu0 %v468
      %513 = vmatprep.subr.bf16.mxu0 0
      %514 = vmatpush1.bf16.msra.mxu0 %v469
      %515 = vmatprep.subr.bf16.mxu0 0
      %516 = vmatpush1.bf16.msra.mxu0 %v470
      %517 = vmatprep.subr.bf16.mxu0 0
      %518 = vmatpush1.bf16.msra.mxu0 %v471
      %519 = vmatprep.subr.bf16.mxu0 0
      %520 = vmatpush1.bf16.msra.mxu0 %v472
      %521 = vmatprep.mubr.bf16.mxu0 %v362
      %522 = vmatmul.mubr.bf16.gmra.mrb[0].mxu0 %v361
      %v523 = vpop.f32.mrb[0].mxu0
      %v524 = vadd.f32 0.0, %v523
      %v525 = vpop.f32.mrb[0].mxu0
      %v526 = vpop.f32.mrb[0].mxu0
      %v527 = vadd.f32 0.0, %v526
      %v528 = vpop.f32.mrb[0].mxu0
      %529 = vmatprep.mubr.bf16.mxu0 %v364
      %530 = vmatmul.mubr.bf16.gmra.mrb[0].mxu0 %v363
      %v531 = vpop.f32.mrb[0].mxu0
      %v532 = vadd.f32 0.0, %v531
      %v533 = vpop.f32.mrb[0].mxu0
      %v534 = vpop.f32.mrb[0].mxu0
      %v535 = vadd.f32 0.0, %v534
      %v536 = vpop.f32.mrb[0].mxu0
      %537 = vmatprep.mubr.bf16.mxu0 %v366
      %538 = vmatmul.mubr.bf16.gmra.mrb[0].mxu0 %v365
      %v539 = vpop.f32.mrb[0].mxu0
      %v540 = vadd.f32 0.0, %v539
      %v541 = vpop.f32.mrb[0].mxu0
      %v542 = vpop.f32.mrb[0].mxu0
      %v543 = vadd.f32 0.0, %v542
      %v544 = vpop.f32.mrb[0].mxu0
      %545 = vmatprep.mubr.bf16.mxu0 %v368
      %546 = vmatmul.mubr.bf16.gmra.mrb[0].mxu0 %v367
      %v547 = vpop.f32.mrb[0].mxu0
      %v548 = vadd.f32 0.0, %v547
      %v549 = vpop.f32.mrb[0].mxu0
      %v550 = vpop.f32.mrb[0].mxu0
      %v551 = vadd.f32 0.0, %v550
      %v552 = vpop.f32.mrb[0].mxu0
      %553 = vmatprep.mubr.bf16.mxu0 %v370
      %554 = vmatmul.mubr.bf16.gmra.mrb[0].mxu0 %v369
      %v555 = vpop.f32.mrb[0].mxu0
      %v556 = vadd.f32 0.0, %v555
      %v557 = vpop.f32.mrb[0].mxu0
      %v558 = vpop.f32.mrb[0].mxu0
      %v559 = vadd.f32 0.0, %v558
      %v560 = vpop.f32.mrb[0].mxu0
      %561 = vmatprep.mubr.bf16.mxu0 %v372
      %562 = vmatmul.mubr.bf16.gmra.mrb[0].mxu0 %v371
      %v563 = vpop.f32.mrb[0].mxu0
      %v564 = vadd.f32 0.0, %v563
      %v565 = vpop.f32.mrb[0].mxu0
      %v566 = vpop.f32.mrb[0].mxu0
      %v567 = vadd.f32 0.0, %v566
      %v568 = vpop.f32.mrb[0].mxu0
      %569 = vmatprep.mubr.bf16.mxu0 %v374
      %570 = vmatmul.mubr.bf16.gmra.mrb[0].mxu0 %v373
      %v571 = vpop.f32.mrb[0].mxu0
      %v572 = vadd.f32 0.0, %v571
      %v573 = vpop.f32.mrb[0].mxu0
      %v574 = vpop.f32.mrb[0].mxu0
      %v575 = vadd.f32 0.0, %v574
      %v576 = vpop.f32.mrb[0].mxu0
      %577 = vmatprep.mubr.bf16.mxu0 %v376
      %578 = vmatmul.mubr.bf16.gmra.mrb[0].mxu0 %v375
      %v579 = vpop.f32.mrb[0].mxu0
      %v580 = vadd.f32 0.0, %v579
      %v581 = vpop.f32.mrb[0].mxu0
      %v582 = vpop.f32.mrb[0].mxu0
      %v583 = vadd.f32 0.0, %v582
      %v584 = vpop.f32.mrb[0].mxu0
      %585 = vdwg.mxu0
      %586 = vst [vmem:[%s250] sm:$0xff] %v524
      %587 = vst [vmem:[%s250 + $0x8] sm:$0xff] %v527
      %588 = vst [vmem:[%s250 + $0x10] sm:$0xff] %v532
      %589 = vst [vmem:[%s250 + $0x18] sm:$0xff] %v535
      %590 = vst [vmem:[%s250 + $0x20] sm:$0xff] %v540
      %591 = vst [vmem:[%s250 + $0x28] sm:$0xff] %v543
      %592 = vst [vmem:[%s250 + $0x30] sm:$0xff] %v548
      %593 = vst [vmem:[%s250 + $0x38] sm:$0xff] %v551
      %594 = vst [vmem:[%s250 + $0x40] sm:$0xff] %v556
      %595 = vst [vmem:[%s250 + $0x48] sm:$0xff] %v559
      %596 = vst [vmem:[%s250 + $0x50] sm:$0xff] %v564
      %597 = vst [vmem:[%s250 + $0x58] sm:$0xff] %v567
      %598 = vst [vmem:[%s250 + $0x60] sm:$0xff] %v572
      %599 = vst [vmem:[%s250 + $0x68] sm:$0xff] %v575
      %600 = vst [vmem:[%s250 + $0x70] sm:$0xff] %v580
      %601 = vst [vmem:[%s250 + $0x78] sm:$0xff] %v583
      %v602 = vld [vmem:[%s254] sm:$0x1]
      %v603 = vadd.f32 %v524, %v527
      %v604 = vadd.f32 %v603, %v532
      %v605 = vadd.f32 %v604, %v535
      %v606 = vadd.f32 %v605, %v540
      %v607 = vadd.f32 %v606, %v543
      %v608 = vadd.f32 %v607, %v548
      %v609 = vadd.f32 %v608, %v551
      %v610 = vadd.f32 %v609, %v556
      %v611 = vadd.f32 %v610, %v559
      %v612 = vadd.f32 %v611, %v564
      %v613 = vadd.f32 %v612, %v567
      %v614 = vadd.f32 %v613, %v572
      %v615 = vadd.f32 %v614, %v575
      %v616 = vadd.f32 %v615, %v580
      %v617 = vadd.f32 %v616, %v583
      %v618 = vrot.slane %v617, 4
      %v619 = vadd.f32 %v617, %v618
      %v620 = vrot.slane %v619, 2
      %v621 = vadd.f32 %v619, %v620
      %v622 = vrot.slane %v621, 1
      %v623 = vadd.f32 %v621, %v622
      %v624 = vadd.f32 %v602, %v623
      %625 = vst [vmem:[%s254] sm:$0x1] %v624
      %v626 = vld [vmem:[%s257] sm:$0x1]
      %v627 = vmul.f32 %v524, %v524
      %v628 = vmul.f32 %v527, %v527
      %v629 = vmul.f32 %v532, %v532
      %v630 = vmul.f32 %v535, %v535
      %v631 = vmul.f32 %v540, %v540
      %v632 = vmul.f32 %v543, %v543
      %v633 = vmul.f32 %v548, %v548
      %v634 = vmul.f32 %v551, %v551
      %v635 = vmul.f32 %v556, %v556
      %v636 = vmul.f32 %v559, %v559
      %v637 = vmul.f32 %v564, %v564
      %v638 = vmul.f32 %v567, %v567
      %v639 = vmul.f32 %v572, %v572
      %v640 = vmul.f32 %v575, %v575
      %v641 = vmul.f32 %v580, %v580
      %v642 = vmul.f32 %v583, %v583
      %v643 = vadd.f32 %v627, %v628
      %v644 = vadd.f32 %v643, %v629
      %v645 = vadd.f32 %v644, %v630
      %v646 = vadd.f32 %v645, %v631
      %v647 = vadd.f32 %v646, %v632
      %v648 = vadd.f32 %v647, %v633
      %v649 = vadd.f32 %v648, %v634
      %v650 = vadd.f32 %v649, %v635
      %v651 = vadd.f32 %v650, %v636
      %v652 = vadd.f32 %v651, %v637
      %v653 = vadd.f32 %v652, %v638
      %v654 = vadd.f32 %v653, %v639
      %v655 = vadd.f32 %v654, %v640
      %v656 = vadd.f32 %v655, %v641
      %v657 = vadd.f32 %v656, %v642
      %v658 = vrot.slane %v657, 4
      %v659 = vadd.f32 %v657, %v658
      %v660 = vrot.slane %v659, 2
      %v661 = vadd.f32 %v659, %v660
      %v662 = vrot.slane %v661, 1
      %v663 = vadd.f32 %v661, %v662
      %v664 = vadd.f32 %v626, %v663
      %665 = vst [vmem:[%s257] sm:$0x1] %v664
      %s666 = smul.u32 16, %s21
      %p667 = scmp.lt.s32.totalorder %s666, 79
      %s668 = scalar_select %p667, %s666, 79
      %p669 = scmp.lt.s32.totalorder %s20, 0
      %s670 = scalar_select %p669, %s20, 0
      %s671 = sadd.s32 %s670, %s668
      %s672 = smul.addr %s671, 8
      %s673 = scalar_lea.vmem %s2, %s672
      %p674 = scmp.lt.s32.totalorder %s20, 0
      %s675 = scalar_select %p674, %s20, 0
      %s676 = scalar_lea.vmem %s3, %s675
      %p677 = scmp.lt.s32.totalorder %s20, 0
      %s678 = scalar_select %p677, %s20, 0
      %s679 = scalar_lea.vmem %s4, %s678
      // Predicated region
      $region33: #{_lambda_.5} parent=27 // pred_check
        %p680 = pneg %p100
      $region34: #{_lambda_.5} parent=27 // pred_check_branch
        %682 = sbr.rel (%p680) target = $region36
      $region35: #{_lambda_.5} parent=27 // pred_region
        %s683 = smul.u32 16, %s21
      $region36: #{_lambda_.5} parent=27 // pred_fallthru
        _
      // Predicated region
      $region37: #{_lambda_.5} parent=27 // pred_check
        %p684 = pneg %p126
      $region38: #{_lambda_.5} parent=27 // pred_check_branch
        %686 = sbr.rel (%p684) target = $region40
      $region39: #{_lambda_.5} parent=27 // pred_region
        _
      $region40: #{_lambda_.5} parent=27 // pred_fallthru
        _
      // Predicated region
      $region41: #{_lambda_.5} parent=27 // pred_check
        %p687 = pneg %p152
      $region42: #{_lambda_.5} parent=27 // pred_check_branch
        %689 = sbr.rel (%p687) target = $region44
      $region43: #{_lambda_.5} parent=27 // pred_region
        _
      $region44: #{_lambda_.5} parent=27 // pred_fallthru
        _
      // Predicated region
      $region45: #{_lambda_.5} parent=27 // pred_check
        %p690 = pneg %p126
      $region46: #{_lambda_.5} parent=27 // pred_check_branch
        %692 = sbr.rel (%p690) target = $region48
      $region47: #{_lambda_.5} parent=27 // pred_region
        %p693 = scmp.lt.s32.totalorder %s20, 0
        %s694 = scalar_select %p693, %s20, 0
        %s695 = scalar_lea.vmem %s3, %s694
      $region48: #{_lambda_.5} parent=27 // pred_fallthru
        _
      // Predicated region
      $region49: #{_lambda_.5} parent=27 // pred_check
        %p696 = pneg %p152
      $region50: #{_lambda_.5} parent=27 // pred_check_branch
        %698 = sbr.rel (%p696) target = $region52
      $region51: #{_lambda_.5} parent=27 // pred_region
        %p699 = scmp.lt.s32.totalorder %s20, 0
        %s700 = scalar_select %p699, %s20, 0
        %s701 = scalar_lea.vmem %s4, %s700
      $region52: #{_lambda_.5} parent=27 // pred_fallthru
        _
    $region28: #{_lambda_.5} parent=5 // pred_fallthru
      _
    %p702 = scmp.le.s32.totalorder 2, %s11
    // Predicated region
    $region53: #{_lambda_.5} parent=5 // pred_check
      %p703 = pneg %p702
    $region54: #{_lambda_.5} parent=5 // pred_check_branch
      %705 = sbr.rel (%p703) target = $region56
    $region55: #{_lambda_.5} parent=5 // pred_region
      %s706 = ssub.s32 %s11, 2
      // Predicated region
      $region57: #{_lambda_.5} parent=55 // pred_check
        %p707 = pneg %p106
      $region58: #{_lambda_.5} parent=55 // pred_check_branch
        %709 = sbr.rel (%p707) target = $region60
      $region59: #{_lambda_.5} parent=55 // pred_region
        %s710 = smul.u32 16, %s23
        %p711 = scmp.lt.s32.totalorder %s710, 79
        %s712 = scalar_select %p711, %s710, 79
        %p713 = scmp.lt.s32.totalorder %s22, 0
        %s714 = scalar_select %p713, %s22, 0
        %s715 = sadd.s32 %s714, %s712
        %s716 = smul.addr %s715, 8
        %s717 = scalar_lea.vmem %s2, %s716
      $region60: #{_lambda_.5} parent=55 // pred_fallthru
        _
    $region56: #{_lambda_.5} parent=5 // pred_fallthru
      _
  $region6: #{_lambda_.5} parent=0 // loop_footer
    %s15 = sadd.s32 1, %s11
  $region7: #{_lambda_.5} parent=0 // loop_footer_branch
    %10 = sbr.rel target = $region3
  $region8: #{_lambda_.5} parent=0 // loop_exit
    _

// kernel: _lambda_.6
$region0: #{_lambda_.6}
  #allocation0 [shape = 'u32[]', space=smem, size = 0x4, offset = 0x4, fixed_abs, tag = 'smem constant byte address 0x4 - core index']
  #allocation1 [shape = 'u32[144,128]{1,0:T(1,128)}', space=vmem, size = 0x12000, scoped, tag = 'internal scratch']
  %s0 = inlined_call_operand.vmem [shape: f32[640,128], index: 0, kind: input, shape index: {}]
  %s1 = inlined_call_operand.vmem [shape: f32[1,128], index: 1, kind: input, shape index: {}]
  %s2 = inlined_call_operand.vmem [shape: f32[1,128], index: 2, kind: input, shape index: {}]
  %s3 = inlined_call_operand.vmem [shape: f32[1,128], index: 3, kind: input, shape index: {}]
  %s4 = inlined_call_operand.vmem [shape: f32[1,128], index: 4, kind: input, shape index: {}]
  %s5 = inlined_call_operand.vmem [shape: f32[640,128], index: 5, kind: output, shape index: {}]
  %s6 = sld [smem:[#allocation0]]
  $region53: #{_lambda_.6} parent=0
    _
  %s8 = ssub.s32 1, %s6
  %s9 = scalar_select 0, %s8, %s6
  loop: start=0, step=1, limit=7
  $region2: #{_lambda_.6} parent=0 // loop_pre_header
    _
  $region3: #{_lambda_.6} parent=0 // loop_header
    %s11 = sphi 0, %s15
    %p12 = scmp.ge.s32.totalorder %s11, 7
    %s18 = sphi 0, %s30
    %s19 = sphi 0, %s26
    %s20 = sphi 0, %s18
    %s21 = sphi 0, %s19
    %s22 = sphi 0, %s20
    %s23 = sphi 0, %s21
    %s35 = sphi 0, %s37
    %s38 = sphi 0, %s35
    %s39 = sphi 0, %s38
    %s55 = sphi 0, %s39
    %s61 = sphi 0, %s63
    %s64 = sphi 0, %s61
    %s65 = sphi 0, %s64
    %s81 = sphi 0, %s65
    %s87 = sphi 0, %s89
    %s90 = sphi 0, %s87
    %s91 = sphi 0, %s90
    %s107 = sphi 0, %s91
    %s113 = sphi 0, %s115
    %s116 = sphi 0, %s113
    %s117 = sphi 0, %s116
    %s133 = sphi 0, %s117
    %s139 = sphi 0, %s141
    %s142 = sphi 0, %s139
    %s143 = sphi 0, %s142
    %s159 = sphi 0, %s143
    %s167 = sphi 0, %s169
    %s170 = sphi 0, %s167
    %s171 = sphi 0, %s170
    %s187 = sphi 0, %s171
  $region4: #{_lambda_.6} parent=0 // loop_header_branch
    %14 = sbr.rel (%p12) target = $region8
  $region5: #{_lambda_.6} parent=0 // loop_body
    %s16 = ssub.s32 %s11, 1
    %s17 = ssub.s32 %s11, 2
    %s24 = sadd.s32 1, %s19
    %p25 = scmp.ge.s32.totalorder %s24, 5
    %s26 = scalar_select %p25, 0, %s24
    %s27 = sadd.s32 1, %s18
    %s28 = scalar_select %p25, %s27, %s18
    %p29 = scmp.ge.s32.totalorder %s28, 1
    %s30 = scalar_select %p29, 0, %s28
    %s31 = ssub.s32 %s19, %s26
    %s32 = ssub.s32 %s18, %s30
    %s33 = sor.u32 %s31, %s32
    %p34 = scmp.eq.s32.totalorder %s33, 0
    %s36 = sadd.s32 %s35, 1
    %s37 = scalar_select %p34, %s35, %s36
    %p40 = pneg %p34
    %p41 = scmp.eq.s32.totalorder %s11, 4
    %p42 = por %p40, %p41
    %p43 = scmp.ne.s32.totalorder %s35, %s38
    %p44 = scmp.eq.s32.totalorder %s11, 0
    %p45 = por %p43, %p44
    %p46 = scmp.ne.s32.totalorder %s35, %s38
    %p47 = scmp.eq.s32.totalorder %s16, 4
    %p48 = por %p46, %p47
    %p49 = scmp.ne.s32.totalorder %s38, %s39
    %p50 = scmp.eq.s32.totalorder %s16, 0
    %p51 = por %p49, %p50
    %p52 = scmp.ne.s32.totalorder %s38, %s39
    %p53 = scmp.eq.s32.totalorder %s17, 4
    %p54 = por %p52, %p53
    %p56 = scmp.ne.s32.totalorder %s39, %s55
    %p57 = scmp.eq.s32.totalorder %s17, 0
    %p58 = por %p56, %p57
    %s59 = ssub.s32 %s18, %s30
    %p60 = scmp.eq.s32.totalorder %s59, 0
    %s62 = sadd.s32 %s61, 1
    %s63 = scalar_select %p60, %s61, %s62
    %p66 = pneg %p60
    %p67 = scmp.eq.s32.totalorder %s11, 4
    %p68 = por %p66, %p67
    %p69 = scmp.ne.s32.totalorder %s61, %s64
    %p70 = scmp.eq.s32.totalorder %s11, 0
    %p71 = por %p69, %p70
    %p72 = scmp.ne.s32.totalorder %s61, %s64
    %p73 = scmp.eq.s32.totalorder %s16, 4
    %p74 = por %p72, %p73
    %p75 = scmp.ne.s32.totalorder %s64, %s65
    %p76 = scmp.eq.s32.totalorder %s16, 0
    %p77 = por %p75, %p76
    %p78 = scmp.ne.s32.totalorder %s64, %s65
    %p79 = scmp.eq.s32.totalorder %s17, 4
    %p80 = por %p78, %p79
    %p82 = scmp.ne.s32.totalorder %s65, %s81
    %p83 = scmp.eq.s32.totalorder %s17, 0
    %p84 = por %p82, %p83
    %s85 = ssub.s32 %s18, %s30
    %p86 = scmp.eq.s32.totalorder %s85, 0
    %s88 = sadd.s32 %s87, 1
    %s89 = scalar_select %p86, %s87, %s88
    %p92 = pneg %p86
    %p93 = scmp.eq.s32.totalorder %s11, 4
    %p94 = por %p92, %p93
    %p95 = scmp.ne.s32.totalorder %s87, %s90
    %p96 = scmp.eq.s32.totalorder %s11, 0
    %p97 = por %p95, %p96
    %p98 = scmp.ne.s32.totalorder %s87, %s90
    %p99 = scmp.eq.s32.totalorder %s16, 4
    %p100 = por %p98, %p99
    %p101 = scmp.ne.s32.totalorder %s90, %s91
    %p102 = scmp.eq.s32.totalorder %s16, 0
    %p103 = por %p101, %p102
    %p104 = scmp.ne.s32.totalorder %s90, %s91
    %p105 = scmp.eq.s32.totalorder %s17, 4
    %p106 = por %p104, %p105
    %p108 = scmp.ne.s32.totalorder %s91, %s107
    %p109 = scmp.eq.s32.totalorder %s17, 0
    %p110 = por %p108, %p109
    %s111 = ssub.s32 %s18, %s30
    %p112 = scmp.eq.s32.totalorder %s111, 0
    %s114 = sadd.s32 %s113, 1
    %s115 = scalar_select %p112, %s113, %s114
    %p118 = pneg %p112
    %p119 = scmp.eq.s32.totalorder %s11, 4
    %p120 = por %p118, %p119
    %p121 = scmp.ne.s32.totalorder %s113, %s116
    %p122 = scmp.eq.s32.totalorder %s11, 0
    %p123 = por %p121, %p122
    %p124 = scmp.ne.s32.totalorder %s113, %s116
    %p125 = scmp.eq.s32.totalorder %s16, 4
    %p126 = por %p124, %p125
    %p127 = scmp.ne.s32.totalorder %s116, %s117
    %p128 = scmp.eq.s32.totalorder %s16, 0
    %p129 = por %p127, %p128
    %p130 = scmp.ne.s32.totalorder %s116, %s117
    %p131 = scmp.eq.s32.totalorder %s17, 4
    %p132 = por %p130, %p131
    %p134 = scmp.ne.s32.totalorder %s117, %s133
    %p135 = scmp.eq.s32.totalorder %s17, 0
    %p136 = por %p134, %p135
    %s137 = ssub.s32 %s18, %s30
    %p138 = scmp.eq.s32.totalorder %s137, 0
    %s140 = sadd.s32 %s139, 1
    %s141 = scalar_select %p138, %s139, %s140
    %p144 = pneg %p138
    %p145 = scmp.eq.s32.totalorder %s11, 4
    %p146 = por %p144, %p145
    %p147 = scmp.ne.s32.totalorder %s139, %s142
    %p148 = scmp.eq.s32.totalorder %s11, 0
    %p149 = por %p147, %p148
    %p150 = scmp.ne.s32.totalorder %s139, %s142
    %p151 = scmp.eq.s32.totalorder %s16, 4
    %p152 = por %p150, %p151
    %p153 = scmp.ne.s32.totalorder %s142, %s143
    %p154 = scmp.eq.s32.totalorder %s16, 0
    %p155 = por %p153, %p154
    %p156 = scmp.ne.s32.totalorder %s142, %s143
    %p157 = scmp.eq.s32.totalorder %s17, 4
    %p158 = por %p156, %p157
    %p160 = scmp.ne.s32.totalorder %s143, %s159
    %p161 = scmp.eq.s32.totalorder %s17, 0
    %p162 = por %p160, %p161
    %s163 = ssub.s32 %s19, %s26
    %s164 = ssub.s32 %s18, %s30
    %s165 = sor.u32 %s163, %s164
    %p166 = scmp.eq.s32.totalorder %s165, 0
    %s168 = sadd.s32 %s167, 1
    %s169 = scalar_select %p166, %s167, %s168
    %p172 = pneg %p166
    %p173 = scmp.eq.s32.totalorder %s11, 4
    %p174 = por %p172, %p173
    %p175 = scmp.ne.s32.totalorder %s167, %s170
    %p176 = scmp.eq.s32.totalorder %s11, 0
    %p177 = por %p175, %p176
    %p178 = scmp.ne.s32.totalorder %s167, %s170
    %p179 = scmp.eq.s32.totalorder %s16, 4
    %p180 = por %p178, %p179
    %p181 = scmp.ne.s32.totalorder %s170, %s171
    %p182 = scmp.eq.s32.totalorder %s16, 0
    %p183 = por %p181, %p182
    %p184 = scmp.ne.s32.totalorder %s170, %s171
    %p185 = scmp.eq.s32.totalorder %s17, 4
    %p186 = por %p184, %p185
    %p188 = scmp.ne.s32.totalorder %s171, %s187
    %p189 = scmp.eq.s32.totalorder %s17, 0
    %p190 = por %p188, %p189
    %p191 = scmp.le.s32.totalorder 1, %s11
    %p192 = scmp.lt.s32.totalorder %s11, 6
    %p193 = pnand %p191, %p192
    %p194 = pneg %p193
    // Predicated region
    $region9: #{_lambda_.6} parent=5 // pred_check
      _
    $region10: #{_lambda_.6} parent=5 // pred_check_branch
      %196 = sbr.rel (%p193) target = $region12
    $region11: #{_lambda_.6} parent=5 // pred_region
      %s197 = ssub.s32 %s11, 1
      // Predicated region
      $region13: #{_lambda_.6} parent=11 // pred_check
        %p198 = pneg %p77
      $region14: #{_lambda_.6} parent=11 // pred_check_branch
        %200 = sbr.rel (%p198) target = $region16
      $region15: #{_lambda_.6} parent=11 // pred_region
        %p201 = scmp.lt.s32.totalorder %s20, 0
        %s202 = scalar_select %p201, %s20, 0
        %s203 = scalar_lea.vmem %s1, %s202
      $region16: #{_lambda_.6} parent=11 // pred_fallthru
        _
      // Predicated region
      $region17: #{_lambda_.6} parent=11 // pred_check
        %p204 = pneg %p103
      $region18: #{_lambda_.6} parent=11 // pred_check_branch
        %206 = sbr.rel (%p204) target = $region20
      $region19: #{_lambda_.6} parent=11 // pred_region
        %p207 = scmp.lt.s32.totalorder %s20, 0
        %s208 = scalar_select %p207, %s20, 0
        %s209 = scalar_lea.vmem %s2, %s208
      $region20: #{_lambda_.6} parent=11 // pred_fallthru
        _
      // Predicated region
      $region21: #{_lambda_.6} parent=11 // pred_check
        %p210 = pneg %p129
      $region22: #{_lambda_.6} parent=11 // pred_check_branch
        %212 = sbr.rel (%p210) target = $region24
      $region23: #{_lambda_.6} parent=11 // pred_region
        %p213 = scmp.lt.s32.totalorder %s20, 0
        %s214 = scalar_select %p213, %s20, 0
        %s215 = scalar_lea.vmem %s3, %s214
      $region24: #{_lambda_.6} parent=11 // pred_fallthru
        _
      // Predicated region
      $region25: #{_lambda_.6} parent=11 // pred_check
        %p216 = pneg %p155
      $region26: #{_lambda_.6} parent=11 // pred_check_branch
        %218 = sbr.rel (%p216) target = $region28
      $region27: #{_lambda_.6} parent=11 // pred_region
        %p219 = scmp.lt.s32.totalorder %s20, 0
        %s220 = scalar_select %p219, %s20, 0
        %s221 = scalar_lea.vmem %s4, %s220
      $region28: #{_lambda_.6} parent=11 // pred_fallthru
        _
    $region12: #{_lambda_.6} parent=5 // pred_fallthru
      _
    %p222 = scmp.lt.s32.totalorder %s11, 5
    // Predicated region
    $region29: #{_lambda_.6} parent=5 // pred_check
      %p223 = pneg %p222
    $region30: #{_lambda_.6} parent=5 // pred_check_branch
      %225 = sbr.rel (%p223) target = $region32
    $region31: #{_lambda_.6} parent=5 // pred_region
      // Predicated region
      $region33: #{_lambda_.6} parent=31 // pred_check
        %p226 = pneg %p45
      $region34: #{_lambda_.6} parent=31 // pred_check_branch
        %228 = sbr.rel (%p226) target = $region36
      $region35: #{_lambda_.6} parent=31 // pred_region
        %s229 = smul.u32 16, %s19
        %p230 = scmp.lt.s32.totalorder %s229, 79
        %s231 = scalar_select %p230, %s229, 79
        %p232 = scmp.lt.s32.totalorder %s18, 0
        %s233 = scalar_select %p232, %s18, 0
        %s234 = sadd.s32 %s233, %s231
        %s235 = smul.addr %s234, 8
        %s236 = scalar_lea.vmem %s0, %s235
        %s237 = smul.u32 16, %s19
      $region36: #{_lambda_.6} parent=31 // pred_fallthru
        _
    $region32: #{_lambda_.6} parent=5 // pred_fallthru
      _
    %p238 = scmp.le.s32.totalorder 1, %s11
    %p239 = scmp.lt.s32.totalorder %s11, 6
    %p240 = pnand %p238, %p239
    %p241 = pneg %p240
    // Predicated region
    $region37: #{_lambda_.6} parent=5 // pred_check
      _
    $region38: #{_lambda_.6} parent=5 // pred_check_branch
      %243 = sbr.rel (%p240) target = $region40
    $region39: #{_lambda_.6} parent=5 // pred_region
      %s244 = ssub.s32 %s11, 1
      %s245 = smul.u32 16, %s21
      %p246 = scmp.lt.s32.totalorder %s245, 79
      %s247 = scalar_select %p246, %s245, 79
      %p248 = scmp.lt.s32.totalorder %s20, 0
      %s249 = scalar_select %p248, %s20, 0
      %s250 = sadd.s32 %s249, %s247
      %s251 = smul.addr %s250, 8
      %s252 = scalar_lea.vmem %s0, %s251
      %p253 = pneg %p51
      %p254 = pneg %p48
      %p255 = scmp.lt.s32.totalorder %s20, 0
      %s256 = scalar_select %p255, %s20, 0
      %s257 = scalar_lea.vmem %s1, %s256
      %p258 = pneg %p77
      %p259 = pneg %p74
      %p260 = scmp.lt.s32.totalorder %s20, 0
      %s261 = scalar_select %p260, %s20, 0
      %s262 = scalar_lea.vmem %s2, %s261
      %p263 = pneg %p103
      %p264 = pneg %p100
      %p265 = scmp.lt.s32.totalorder %s20, 0
      %s266 = scalar_select %p265, %s20, 0
      %s267 = scalar_lea.vmem %s3, %s266
      %p268 = pneg %p129
      %p269 = pneg %p126
      %p270 = scmp.lt.s32.totalorder %s20, 0
      %s271 = scalar_select %p270, %s20, 0
      %s272 = scalar_lea.vmem %s4, %s271
      %p273 = pneg %p155
      %p274 = pneg %p152
      %p275 = pneg %p183
      %p276 = pneg %p180
      %s277 = smul.u32 16, %s21
      %p278 = scmp.lt.s32.totalorder %s277, 79
      %s279 = scalar_select %p278, %s277, 79
      %p280 = scmp.lt.s32.totalorder %s20, 0
      %s281 = scalar_select %p280, %s20, 0
      %s282 = sadd.s32 %s281, %s279
      %s283 = smul.addr %s282, 8
      %s284 = scalar_lea.vmem %s5, %s283
      %s285 = smul.u32 16, %s21
      %p286 = scmp.lt.s32.totalorder %s285, 79
      %s287 = scalar_select %p286, %s285, 79
      %p288 = scmp.lt.s32.totalorder %s20, 0
      %s289 = scalar_select %p288, %s20, 0
      %s290 = sadd.s32 %s289, %s287
      %s291 = smul.addr %s290, 8
      %s292 = scalar_lea.vmem %s0, %s291
      %s293 = smul.u32 16, %s21
      %p294 = scmp.lt.s32.totalorder %s20, 0
      %s295 = scalar_select %p294, %s20, 0
      %s296 = scalar_lea.vmem %s1, %s295
      %p297 = scmp.lt.s32.totalorder %s20, 0
      %s298 = scalar_select %p297, %s20, 0
      %s299 = scalar_lea.vmem %s2, %s298
      %p300 = scmp.lt.s32.totalorder %s20, 0
      %s301 = scalar_select %p300, %s20, 0
      %s302 = scalar_lea.vmem %s3, %s301
      %p303 = scmp.lt.s32.totalorder %s20, 0
      %s304 = scalar_select %p303, %s20, 0
      %s305 = scalar_lea.vmem %s4, %s304
      %s306 = smul.u32 16, %s21
      %p307 = scmp.lt.s32.totalorder %s306, 79
      %s308 = scalar_select %p307, %s306, 79
      %p309 = scmp.lt.s32.totalorder %s20, 0
      %s310 = scalar_select %p309, %s20, 0
      %s311 = sadd.s32 %s310, %s308
      %s312 = smul.addr %s311, 8
      %s313 = scalar_lea.vmem %s5, %s312
      %s314 = smul.u32 16, %s21
      %v315 = vld [vmem:[%s296] sm:$0x1]
      %v316 = vmul.f32 %v315, 0.0017361111
      %v317 = vld [vmem:[%s299] sm:$0x1]
      %v318 = vmul.f32 %v317, 0.0017361111
      %v319 = vmul.f32 %v316, %v316
      %v320 = vsub.f32 %v318, %v319
      %v321 = vmax.f32 %v320, 0.0
      %v322 = vld [vmem:[%s292] sm:$0xff]
      %v323 = vld [vmem:[%s292 + $0x8] sm:$0xff]
      %v324 = vld [vmem:[%s292 + $0x10] sm:$0xff]
      %v325 = vld [vmem:[%s292 + $0x18] sm:$0xff]
      %v326 = vld [vmem:[%s292 + $0x20] sm:$0xff]
      %v327 = vld [vmem:[%s292 + $0x28] sm:$0xff]
      %v328 = vld [vmem:[%s292 + $0x30] sm:$0xff]
      %v329 = vld [vmem:[%s292 + $0x38] sm:$0xff]
      %v330 = vld [vmem:[%s292 + $0x40] sm:$0xff]
      %v331 = vld [vmem:[%s292 + $0x48] sm:$0xff]
      %v332 = vld [vmem:[%s292 + $0x50] sm:$0xff]
      %v333 = vld [vmem:[%s292 + $0x58] sm:$0xff]
      %v334 = vld [vmem:[%s292 + $0x60] sm:$0xff]
      %v335 = vld [vmem:[%s292 + $0x68] sm:$0xff]
      %v336 = vld [vmem:[%s292 + $0x70] sm:$0xff]
      %v337 = vld [vmem:[%s292 + $0x78] sm:$0xff]
      %v339 = vlaneseq
      %v340 = vshrl.u32 %v339, 7
      %v341 = vsub.s32 0, %v340
      %v342 = vrot.slane %v316, %v341
      %v344 = vsub.f32 %v322, %v342
      %v345 = vsub.f32 %v323, %v342
      %v346 = vsub.f32 %v324, %v342
      %v347 = vsub.f32 %v325, %v342
      %v348 = vsub.f32 %v326, %v342
      %v349 = vsub.f32 %v327, %v342
      %v350 = vsub.f32 %v328, %v342
      %v351 = vsub.f32 %v329, %v342
      %v352 = vsub.f32 %v330, %v342
      %v353 = vsub.f32 %v331, %v342
      %v354 = vsub.f32 %v332, %v342
      %v355 = vsub.f32 %v333, %v342
      %v356 = vsub.f32 %v334, %v342
      %v357 = vsub.f32 %v335, %v342
      %v358 = vsub.f32 %v336, %v342
      %v359 = vsub.f32 %v337, %v342
      %v360 = vadd.f32 %v321, 1e-05
      %v361 = vrsqrt.pop %v360
      %v363 = vlaneseq
      %v364 = vshrl.u32 %v363, 7
      %v365 = vsub.s32 0, %v364
      %v366 = vrot.slane %v361, %v365
      %v368 = vmul.f32 %v344, %v366
      %v369 = vmul.f32 %v345, %v366
      %v370 = vmul.f32 %v346, %v366
      %v371 = vmul.f32 %v347, %v366
      %v372 = vmul.f32 %v348, %v366
      %v373 = vmul.f32 %v349, %v366
      %v374 = vmul.f32 %v350, %v366
      %v375 = vmul.f32 %v351, %v366
      %v376 = vmul.f32 %v352, %v366
      %v377 = vmul.f32 %v353, %v366
      %v378 = vmul.f32 %v354, %v366
      %v379 = vmul.f32 %v355, %v366
      %v380 = vmul.f32 %v356, %v366
      %v381 = vmul.f32 %v357, %v366
      %v382 = vmul.f32 %v358, %v366
      %v383 = vmul.f32 %v359, %v366
      %v384 = vld [vmem:[%s302] sm:$0x1]
      %v386 = vlaneseq
      %v387 = vshrl.u32 %v386, 7
      %v388 = vsub.s32 0, %v387
      %v389 = vrot.slane %v384, %v388
      %v391 = vmul.f32 %v368, %v389
      %v392 = vmul.f32 %v369, %v389
      %v393 = vmul.f32 %v370, %v389
      %v394 = vmul.f32 %v371, %v389
      %v395 = vmul.f32 %v372, %v389
      %v396 = vmul.f32 %v373, %v389
      %v397 = vmul.f32 %v374, %v389
      %v398 = vmul.f32 %v375, %v389
      %v399 = vmul.f32 %v376, %v389
      %v400 = vmul.f32 %v377, %v389
      %v401 = vmul.f32 %v378, %v389
      %v402 = vmul.f32 %v379, %v389
      %v403 = vmul.f32 %v380, %v389
      %v404 = vmul.f32 %v381, %v389
      %v405 = vmul.f32 %v382, %v389
      %v406 = vmul.f32 %v383, %v389
      %v407 = vld [vmem:[%s305] sm:$0x1]
      %v409 = vlaneseq
      %v410 = vshrl.u32 %v409, 7
      %v411 = vsub.s32 0, %v410
      %v412 = vrot.slane %v407, %v411
      %v414 = vadd.f32 %v391, %v412
      %v415 = vadd.f32 %v392, %v412
      %v416 = vadd.f32 %v393, %v412
      %v417 = vadd.f32 %v394, %v412
      %v418 = vadd.f32 %v395, %v412
      %v419 = vadd.f32 %v396, %v412
      %v420 = vadd.f32 %v397, %v412
      %v421 = vadd.f32 %v398, %v412
      %v422 = vadd.f32 %v399, %v412
      %v423 = vadd.f32 %v400, %v412
      %v424 = vadd.f32 %v401, %v412
      %v425 = vadd.f32 %v402, %v412
      %v426 = vadd.f32 %v403, %v412
      %v427 = vadd.f32 %v404, %v412
      %v428 = vadd.f32 %v405, %v412
      %v429 = vadd.f32 %v406, %v412
      %v430 = vmax.f32 %v414, 0.0
      %v431 = vmax.f32 %v415, 0.0
      %v432 = vmax.f32 %v416, 0.0
      %v433 = vmax.f32 %v417, 0.0
      %v434 = vmax.f32 %v418, 0.0
      %v435 = vmax.f32 %v419, 0.0
      %v436 = vmax.f32 %v420, 0.0
      %v437 = vmax.f32 %v421, 0.0
      %v438 = vmax.f32 %v422, 0.0
      %v439 = vmax.f32 %v423, 0.0
      %v440 = vmax.f32 %v424, 0.0
      %v441 = vmax.f32 %v425, 0.0
      %v442 = vmax.f32 %v426, 0.0
      %v443 = vmax.f32 %v427, 0.0
      %v444 = vmax.f32 %v428, 0.0
      %v445 = vmax.f32 %v429, 0.0
      %446 = vst [vmem:[%s313] sm:$0xff] %v430
      %447 = vst [vmem:[%s313 + $0x8] sm:$0xff] %v431
      %448 = vst [vmem:[%s313 + $0x10] sm:$0xff] %v432
      %449 = vst [vmem:[%s313 + $0x18] sm:$0xff] %v433
      %450 = vst [vmem:[%s313 + $0x20] sm:$0xff] %v434
      %451 = vst [vmem:[%s313 + $0x28] sm:$0xff] %v435
      %452 = vst [vmem:[%s313 + $0x30] sm:$0xff] %v436
      %453 = vst [vmem:[%s313 + $0x38] sm:$0xff] %v437
      %454 = vst [vmem:[%s313 + $0x40] sm:$0xff] %v438
      %455 = vst [vmem:[%s313 + $0x48] sm:$0xff] %v439
      %456 = vst [vmem:[%s313 + $0x50] sm:$0xff] %v440
      %457 = vst [vmem:[%s313 + $0x58] sm:$0xff] %v441
      %458 = vst [vmem:[%s313 + $0x60] sm:$0xff] %v442
      %459 = vst [vmem:[%s313 + $0x68] sm:$0xff] %v443
      %460 = vst [vmem:[%s313 + $0x70] sm:$0xff] %v444
      %461 = vst [vmem:[%s313 + $0x78] sm:$0xff] %v445
      %s462 = smul.u32 16, %s21
      %p463 = scmp.lt.s32.totalorder %s462, 79
      %s464 = scalar_select %p463, %s462, 79
      %p465 = scmp.lt.s32.totalorder %s20, 0
      %s466 = scalar_select %p465, %s20, 0
      %s467 = sadd.s32 %s466, %s464
      %s468 = smul.addr %s467, 8
      %s469 = scalar_lea.vmem %s5, %s468
      // Predicated region
      $region41: #{_lambda_.6} parent=39 // pred_check
        %p470 = pneg %p180
      $region42: #{_lambda_.6} parent=39 // pred_check_branch
        %472 = sbr.rel (%p470) target = $region44
      $region43: #{_lambda_.6} parent=39 // pred_region
        %s473 = smul.u32 16, %s21
      $region44: #{_lambda_.6} parent=39 // pred_fallthru
        _
    $region40: #{_lambda_.6} parent=5 // pred_fallthru
      _
    %p474 = scmp.le.s32.totalorder 2, %s11
    // Predicated region
    $region45: #{_lambda_.6} parent=5 // pred_check
      %p475 = pneg %p474
    $region46: #{_lambda_.6} parent=5 // pred_check_branch
      %477 = sbr.rel (%p475) target = $region48
    $region47: #{_lambda_.6} parent=5 // pred_region
      %s478 = ssub.s32 %s11, 2
      // Predicated region
      $region49: #{_lambda_.6} parent=47 // pred_check
        %p479 = pneg %p186
      $region50: #{_lambda_.6} parent=47 // pred_check_branch
        %481 = sbr.rel (%p479) target = $region52
      $region51: #{_lambda_.6} parent=47 // pred_region
        %s482 = smul.u32 16, %s23
        %p483 = scmp.lt.s32.totalorder %s482, 79
        %s484 = scalar_select %p483, %s482, 79
        %p485 = scmp.lt.s32.totalorder %s22, 0
        %s486 = scalar_select %p485, %s22, 0
        %s487 = sadd.s32 %s486, %s484
        %s488 = smul.addr %s487, 8
        %s489 = scalar_lea.vmem %s5, %s488
      $region52: #{_lambda_.6} parent=47 // pred_fallthru
        _
    $region48: #{_lambda_.6} parent=5 // pred_fallthru
      _
  $region6: #{_lambda_.6} parent=0 // loop_footer
    %s15 = sadd.s32 1, %s11
  $region7: #{_lambda_.6} parent=0 // loop_footer_branch
    %10 = sbr.rel target = $region3
  $region8: #{_lambda_.6} parent=0 // loop_exit
    _

// kernel: _lambda_.7
$region0: #{_lambda_.7}
  #allocation0 [shape = 'u32[]', space=smem, size = 0x4, offset = 0x4, fixed_abs, tag = 'smem constant byte address 0x4 - core index']
  #allocation1 [shape = 'u32[144,128]{1,0:T(1,128)}', space=vmem, size = 0x12000, scoped, tag = 'internal scratch']
  %s0 = inlined_call_operand.vmem [shape: bf16[64,256], index: 0, kind: input, shape index: {}]
  %s1 = inlined_call_operand.vmem [shape: bf16[256,128], index: 1, kind: input, shape index: {}]
  %s2 = inlined_call_operand.vmem [shape: f32[1,128], index: 2, kind: input, shape index: {}]
  %s3 = inlined_call_operand.vmem [shape: f32[1,128], index: 3, kind: input, shape index: {}]
  %s4 = inlined_call_operand.vmem [shape: f32[64,128], index: 4, kind: output, shape index: {}]
  %s5 = sld [smem:[#allocation0]]
  $region26: #{_lambda_.7} parent=0
    _
  %s7 = ssub.s32 1, %s5
  %s8 = scalar_select 0, %s7, %s5
  // Predicated region
  $region2: #{_lambda_.7} parent=0 // pred_check
    _
  $region3: #{_lambda_.7} parent=0 // pred_check_branch
    %10 = sbr.rel (0) target = $region5
  $region4: #{_lambda_.7} parent=0 // pred_region
    _
  $region5: #{_lambda_.7} parent=0 // pred_fallthru
    _
  // Predicated region
  $region6: #{_lambda_.7} parent=0 // pred_check
    _
  $region7: #{_lambda_.7} parent=0 // pred_check_branch
    %12 = sbr.rel (0) target = $region9
  $region8: #{_lambda_.7} parent=0 // pred_region
    _
  $region9: #{_lambda_.7} parent=0 // pred_fallthru
    _
  // Predicated region
  $region10: #{_lambda_.7} parent=0 // pred_check
    _
  $region11: #{_lambda_.7} parent=0 // pred_check_branch
    %14 = sbr.rel (0) target = $region13
  $region12: #{_lambda_.7} parent=0 // pred_region
    _
  $region13: #{_lambda_.7} parent=0 // pred_fallthru
    _
  // Predicated region
  $region14: #{_lambda_.7} parent=0 // pred_check
    _
  $region15: #{_lambda_.7} parent=0 // pred_check_branch
    %16 = sbr.rel (0) target = $region17
  $region16: #{_lambda_.7} parent=0 // pred_region
    _
  $region17: #{_lambda_.7} parent=0 // pred_fallthru
    _
  %v18 = vld [vmem:[%s0] sm:$0xff]
  %v19 = vld [vmem:[%s0 + $0x8] sm:$0xff]
  %v20 = vld [vmem:[%s0 + $0x10] sm:$0xff]
  %v21 = vld [vmem:[%s0 + $0x18] sm:$0xff]
  %v22 = vld [vmem:[%s0 + $0x20] sm:$0xff]
  %v23 = vld [vmem:[%s0 + $0x28] sm:$0xff]
  %v24 = vld [vmem:[%s0 + $0x30] sm:$0xff]
  %v25 = vld [vmem:[%s0 + $0x38] sm:$0xff]
  %v26 = vld [vmem:[%s1] sm:$0xf]
  %v27 = vld [vmem:[%s1 + $0x4] sm:$0xf]
  %v28 = vld [vmem:[%s1 + $0x8] sm:$0xf]
  %v29 = vld [vmem:[%s1 + $0xc] sm:$0xf]
  %v30 = vld [vmem:[%s1 + $0x10] sm:$0xf]
  %v31 = vld [vmem:[%s1 + $0x14] sm:$0xf]
  %v32 = vld [vmem:[%s1 + $0x18] sm:$0xf]
  %v33 = vld [vmem:[%s1 + $0x1c] sm:$0xf]
  %v34 = vld [vmem:[%s1 + $0x20] sm:$0xf]
  %v35 = vld [vmem:[%s1 + $0x24] sm:$0xf]
  %v36 = vld [vmem:[%s1 + $0x28] sm:$0xf]
  %v37 = vld [vmem:[%s1 + $0x2c] sm:$0xf]
  %v38 = vld [vmem:[%s1 + $0x30] sm:$0xf]
  %v39 = vld [vmem:[%s1 + $0x34] sm:$0xf]
  %v40 = vld [vmem:[%s1 + $0x38] sm:$0xf]
  %v41 = vld [vmem:[%s1 + $0x3c] sm:$0xf]
  %v42 = vld [vmem:[%s1 + $0x40] sm:$0xf]
  %v43 = vld [vmem:[%s1 + $0x44] sm:$0xf]
  %v44 = vld [vmem:[%s1 + $0x48] sm:$0xf]
  %v45 = vld [vmem:[%s1 + $0x4c] sm:$0xf]
  %v46 = vld [vmem:[%s1 + $0x50] sm:$0xf]
  %v47 = vld [vmem:[%s1 + $0x54] sm:$0xf]
  %v48 = vld [vmem:[%s1 + $0x58] sm:$0xf]
  %v49 = vld [vmem:[%s1 + $0x5c] sm:$0xf]
  %v50 = vld [vmem:[%s1 + $0x60] sm:$0xf]
  %v51 = vld [vmem:[%s1 + $0x64] sm:$0xf]
  %v52 = vld [vmem:[%s1 + $0x68] sm:$0xf]
  %v53 = vld [vmem:[%s1 + $0x6c] sm:$0xf]
  %v54 = vld [vmem:[%s1 + $0x70] sm:$0xf]
  %v55 = vld [vmem:[%s1 + $0x74] sm:$0xf]
  %v56 = vld [vmem:[%s1 + $0x78] sm:$0xf]
  %v57 = vld [vmem:[%s1 + $0x7c] sm:$0xf]
  %v66 = vunpack.c.l.b16 %v18
  %v67 = vunpack.c.h.b16 %v18
  %v68 = vunpack.c.l.b16 %v19
  %v69 = vunpack.c.h.b16 %v19
  %v70 = vunpack.c.l.b16 %v20
  %v71 = vunpack.c.h.b16 %v20
  %v72 = vunpack.c.l.b16 %v21
  %v73 = vunpack.c.h.b16 %v21
  %v74 = vunpack.c.l.b16 %v22
  %v75 = vunpack.c.h.b16 %v22
  %v76 = vunpack.c.l.b16 %v23
  %v77 = vunpack.c.h.b16 %v23
  %v78 = vunpack.c.l.b16 %v24
  %v79 = vunpack.c.h.b16 %v24
  %v80 = vunpack.c.l.b16 %v25
  %v81 = vunpack.c.h.b16 %v25
  %v82 = vpack.c.b16 %v68, %v66
  %v83 = vpack.c.b16 %v69, %v67
  %v84 = vpack.c.b16 %v72, %v70
  %v85 = vpack.c.b16 %v73, %v71
  %v86 = vpack.c.b16 %v76, %v74
  %v87 = vpack.c.b16 %v77, %v75
  %v88 = vpack.c.b16 %v80, %v78
  %v89 = vpack.c.b16 %v81, %v79
  %v130 = vunpack.c.l.b16 %v26
  %v131 = vunpack.c.l.b16 %v27
  %v132 = vunpack.c.l.b16 %v28
  %v133 = vunpack.c.l.b16 %v29
  %v134 = vunpack.c.l.b16 %v30
  %v135 = vunpack.c.l.b16 %v31
  %v136 = vunpack.c.l.b16 %v32
  %v137 = vunpack.c.l.b16 %v33
  %v138 = vunpack.c.l.b16 %v34
  %v139 = vunpack.c.l.b16 %v35
  %v140 = vunpack.c.l.b16 %v36
  %v141 = vunpack.c.l.b16 %v37
  %v142 = vunpack.c.l.b16 %v38
  %v143 = vunpack.c.l.b16 %v39
  %v144 = vunpack.c.l.b16 %v40
  %v145 = vunpack.c.l.b16 %v41
  %v146 = vunpack.c.l.b16 %v42
  %v147 = vunpack.c.l.b16 %v43
  %v148 = vunpack.c.l.b16 %v44
  %v149 = vunpack.c.l.b16 %v45
  %v150 = vunpack.c.l.b16 %v46
  %v151 = vunpack.c.l.b16 %v47
  %v152 = vunpack.c.l.b16 %v48
  %v153 = vunpack.c.l.b16 %v49
  %v154 = vunpack.c.l.b16 %v50
  %v155 = vunpack.c.l.b16 %v51
  %v156 = vunpack.c.l.b16 %v52
  %v157 = vunpack.c.l.b16 %v53
  %v158 = vunpack.c.l.b16 %v54
  %v159 = vunpack.c.l.b16 %v55
  %v160 = vunpack.c.l.b16 %v56
  %v161 = vunpack.c.l.b16 %v57
  %v162 = vpack.c.b16 %v131, %v130
  %v163 = vpack.c.b16 %v133, %v132
  %v164 = vpack.c.b16 %v135, %v134
  %v165 = vpack.c.b16 %v137, %v136
  %v166 = vpack.c.b16 %v139, %v138
  %v167 = vpack.c.b16 %v141, %v140
  %v168 = vpack.c.b16 %v143, %v142
  %v169 = vpack.c.b16 %v145, %v144
  %v170 = vpack.c.b16 %v147, %v146
  %v171 = vpack.c.b16 %v149, %v148
  %v172 = vpack.c.b16 %v151, %v150
  %v173 = vpack.c.b16 %v153, %v152
  %v174 = vpack.c.b16 %v155, %v154
  %v175 = vpack.c.b16 %v157, %v156
  %v176 = vpack.c.b16 %v159, %v158
  %v177 = vpack.c.b16 %v161, %v160
  %194 = vmatprep.subr.bf16.mxu0 0
  %195 = vmatpush1.bf16.msra.mxu0 %v162
  %196 = vmatprep.subr.bf16.mxu0 0
  %197 = vmatpush1.bf16.msra.mxu0 %v163
  %198 = vmatprep.subr.bf16.mxu0 0
  %199 = vmatpush1.bf16.msra.mxu0 %v164
  %200 = vmatprep.subr.bf16.mxu0 0
  %201 = vmatpush1.bf16.msra.mxu0 %v165
  %202 = vmatprep.subr.bf16.mxu0 0
  %203 = vmatpush1.bf16.msra.mxu0 %v166
  %204 = vmatprep.subr.bf16.mxu0 0
  %205 = vmatpush1.bf16.msra.mxu0 %v167
  %206 = vmatprep.subr.bf16.mxu0 0
  %207 = vmatpush1.bf16.msra.mxu0 %v168
  %208 = vmatprep.subr.bf16.mxu0 0
  %209 = vmatpush1.bf16.msra.mxu0 %v169
  %210 = vmatprep.subr.bf16.mxu0 0
  %211 = vmatpush1.bf16.msra.mxu0 %v170
  %212 = vmatprep.subr.bf16.mxu0 0
  %213 = vmatpush1.bf16.msra.mxu0 %v171
  %214 = vmatprep.subr.bf16.mxu0 0
  %215 = vmatpush1.bf16.msra.mxu0 %v172
  %216 = vmatprep.subr.bf16.mxu0 0
  %217 = vmatpush1.bf16.msra.mxu0 %v173
  %218 = vmatprep.subr.bf16.mxu0 0
  %219 = vmatpush1.bf16.msra.mxu0 %v174
  %220 = vmatprep.subr.bf16.mxu0 0
  %221 = vmatpush1.bf16.msra.mxu0 %v175
  %222 = vmatprep.subr.bf16.mxu0 0
  %223 = vmatpush1.bf16.msra.mxu0 %v176
  %224 = vmatprep.subr.bf16.mxu0 0
  %225 = vmatpush1.bf16.msra.mxu0 %v177
  %226 = vmatprep.mubr.bf16.mxu0 %v83
  %227 = vmatmul.mubr.bf16.gmra.mrb[0].mxu0 %v82
  %v228 = vpop.f32.mrb[0].mxu0
  %v229 = vadd.f32 0.0, %v228
  %v230 = vpop.f32.mrb[0].mxu0
  %v231 = vpop.f32.mrb[0].mxu0
  %v232 = vadd.f32 0.0, %v231
  %v233 = vpop.f32.mrb[0].mxu0
  %234 = vmatprep.mubr.bf16.mxu0 %v85
  %235 = vmatmul.mubr.bf16.gmra.mrb[0].mxu0 %v84
  %v236 = vpop.f32.mrb[0].mxu0
  %v237 = vadd.f32 0.0, %v236
  %v238 = vpop.f32.mrb[0].mxu0
  %v239 = vpop.f32.mrb[0].mxu0
  %v240 = vadd.f32 0.0, %v239
  %v241 = vpop.f32.mrb[0].mxu0
  %242 = vmatprep.mubr.bf16.mxu0 %v87
  %243 = vmatmul.mubr.bf16.gmra.mrb[0].mxu0 %v86
  %v244 = vpop.f32.mrb[0].mxu0
  %v245 = vadd.f32 0.0, %v244
  %v246 = vpop.f32.mrb[0].mxu0
  %v247 = vpop.f32.mrb[0].mxu0
  %v248 = vadd.f32 0.0, %v247
  %v249 = vpop.f32.mrb[0].mxu0
  %250 = vmatprep.mubr.bf16.mxu0 %v89
  %251 = vmatmul.mubr.bf16.gmra.mrb[0].mxu0 %v88
  %v252 = vpop.f32.mrb[0].mxu0
  %v253 = vadd.f32 0.0, %v252
  %v254 = vpop.f32.mrb[0].mxu0
  %v255 = vpop.f32.mrb[0].mxu0
  %v256 = vadd.f32 0.0, %v255
  %v257 = vpop.f32.mrb[0].mxu0
  %258 = vdwg.mxu0
  %v259 = vadd.f32 %v229, %v232
  %v260 = vadd.f32 %v259, %v237
  %v261 = vadd.f32 %v260, %v240
  %v262 = vadd.f32 %v261, %v245
  %v263 = vadd.f32 %v262, %v248
  %v264 = vadd.f32 %v263, %v253
  %v265 = vadd.f32 %v264, %v256
  %v266 = vrot.slane %v265, 4
  %v267 = vadd.f32 %v265, %v266
  %v268 = vrot.slane %v267, 2
  %v269 = vadd.f32 %v267, %v268
  %v270 = vrot.slane %v269, 1
  %v271 = vadd.f32 %v269, %v270
  %v272 = vmul.f32 %v271, 0.015625
  %v273 = vmul.f32 %v229, %v229
  %v274 = vmul.f32 %v232, %v232
  %v275 = vmul.f32 %v237, %v237
  %v276 = vmul.f32 %v240, %v240
  %v277 = vmul.f32 %v245, %v245
  %v278 = vmul.f32 %v248, %v248
  %v279 = vmul.f32 %v253, %v253
  %v280 = vmul.f32 %v256, %v256
  %v281 = vadd.f32 %v273, %v274
  %v282 = vadd.f32 %v281, %v275
  %v283 = vadd.f32 %v282, %v276
  %v284 = vadd.f32 %v283, %v277
  %v285 = vadd.f32 %v284, %v278
  %v286 = vadd.f32 %v285, %v279
  %v287 = vadd.f32 %v286, %v280
  %v288 = vrot.slane %v287, 4
  %v289 = vadd.f32 %v287, %v288
  %v290 = vrot.slane %v289, 2
  %v291 = vadd.f32 %v289, %v290
  %v292 = vrot.slane %v291, 1
  %v293 = vadd.f32 %v291, %v292
  %v294 = vmul.f32 %v293, 0.015625
  %v295 = vmul.f32 %v272, %v272
  %v296 = vsub.f32 %v294, %v295
  %v297 = vmax.f32 %v296, 0.0
  %v298 = vsub.f32 %v229, %v272
  %v299 = vsub.f32 %v232, %v272
  %v300 = vsub.f32 %v237, %v272
  %v301 = vsub.f32 %v240, %v272
  %v302 = vsub.f32 %v245, %v272
  %v303 = vsub.f32 %v248, %v272
  %v304 = vsub.f32 %v253, %v272
  %v305 = vsub.f32 %v256, %v272
  %v306 = vadd.f32 %v297, 1e-05
  %v307 = vrsqrt.pop %v306
  %v308 = vmul.f32 %v298, %v307
  %v309 = vmul.f32 %v299, %v307
  %v310 = vmul.f32 %v300, %v307
  %v311 = vmul.f32 %v301, %v307
  %v312 = vmul.f32 %v302, %v307
  %v313 = vmul.f32 %v303, %v307
  %v314 = vmul.f32 %v304, %v307
  %v315 = vmul.f32 %v305, %v307
  %v316 = vld [vmem:[%s2] sm:$0x1]
  %v318 = vlaneseq
  %v319 = vshrl.u32 %v318, 7
  %v320 = vsub.s32 0, %v319
  %v321 = vrot.slane %v316, %v320
  %v323 = vmul.f32 %v308, %v321
  %v324 = vmul.f32 %v309, %v321
  %v325 = vmul.f32 %v310, %v321
  %v326 = vmul.f32 %v311, %v321
  %v327 = vmul.f32 %v312, %v321
  %v328 = vmul.f32 %v313, %v321
  %v329 = vmul.f32 %v314, %v321
  %v330 = vmul.f32 %v315, %v321
  %v331 = vld [vmem:[%s3] sm:$0x1]
  %v333 = vlaneseq
  %v334 = vshrl.u32 %v333, 7
  %v335 = vsub.s32 0, %v334
  %v336 = vrot.slane %v331, %v335
  %v338 = vadd.f32 %v323, %v336
  %v339 = vadd.f32 %v324, %v336
  %v340 = vadd.f32 %v325, %v336
  %v341 = vadd.f32 %v326, %v336
  %v342 = vadd.f32 %v327, %v336
  %v343 = vadd.f32 %v328, %v336
  %v344 = vadd.f32 %v329, %v336
  %v345 = vadd.f32 %v330, %v336
  %v346 = vmax.f32 %v338, 0.0
  %v347 = vmax.f32 %v339, 0.0
  %v348 = vmax.f32 %v340, 0.0
  %v349 = vmax.f32 %v341, 0.0
  %v350 = vmax.f32 %v342, 0.0
  %v351 = vmax.f32 %v343, 0.0
  %v352 = vmax.f32 %v344, 0.0
  %v353 = vmax.f32 %v345, 0.0
  %354 = vst [vmem:[%s4] sm:$0xff] %v346
  %355 = vst [vmem:[%s4 + $0x8] sm:$0xff] %v347
  %356 = vst [vmem:[%s4 + $0x10] sm:$0xff] %v348
  %357 = vst [vmem:[%s4 + $0x18] sm:$0xff] %v349
  %358 = vst [vmem:[%s4 + $0x20] sm:$0xff] %v350
  %359 = vst [vmem:[%s4 + $0x28] sm:$0xff] %v351
  %360 = vst [vmem:[%s4 + $0x30] sm:$0xff] %v352
  %361 = vst [vmem:[%s4 + $0x38] sm:$0xff] %v353
  // Predicated region
  $region18: #{_lambda_.7} parent=0 // pred_check
    _
  $region19: #{_lambda_.7} parent=0 // pred_check_branch
    %363 = sbr.rel (0) target = $region21
  $region20: #{_lambda_.7} parent=0 // pred_region
    _
  $region21: #{_lambda_.7} parent=0 // pred_fallthru
    _
  // Predicated region
  $region22: #{_lambda_.7} parent=0 // pred_check
    _
  $region23: #{_lambda_.7} parent=0 // pred_check_branch
    %365 = sbr.rel (0) target = $region25
  $region24: #{_lambda_.7} parent=0 // pred_region
    _
  $region25: #{_lambda_.7} parent=0 // pred_fallthru
    _

// kernel: _lambda_.8
$region0: #{_lambda_.8}
  #allocation0 [shape = 'u32[]', space=smem, size = 0x4, offset = 0x4, fixed_abs, tag = 'smem constant byte address 0x4 - core index']
  #allocation1 [shape = 'u32[144,128]{1,0:T(1,128)}', space=vmem, size = 0x12000, scoped, tag = 'internal scratch']
  %s0 = inlined_call_operand.vmem [shape: bf16[16,128], index: 0, kind: input, shape index: {}]
  %s1 = inlined_call_operand.vmem [shape: bf16[128,256], index: 1, kind: input, shape index: {}]
  %s2 = inlined_call_operand.vmem [shape: f32[1,256], index: 2, kind: input, shape index: {}]
  %s3 = inlined_call_operand.vmem [shape: f32[1,256], index: 3, kind: input, shape index: {}]
  %s4 = inlined_call_operand.vmem [shape: f32[16,256], index: 4, kind: output, shape index: {}]
  %s5 = sld [smem:[#allocation0]]
  $region26: #{_lambda_.8} parent=0
    _
  %s7 = ssub.s32 1, %s5
  %s8 = scalar_select 0, %s7, %s5
  // Predicated region
  $region2: #{_lambda_.8} parent=0 // pred_check
    _
  $region3: #{_lambda_.8} parent=0 // pred_check_branch
    %10 = sbr.rel (0) target = $region5
  $region4: #{_lambda_.8} parent=0 // pred_region
    _
  $region5: #{_lambda_.8} parent=0 // pred_fallthru
    _
  // Predicated region
  $region6: #{_lambda_.8} parent=0 // pred_check
    _
  $region7: #{_lambda_.8} parent=0 // pred_check_branch
    %12 = sbr.rel (0) target = $region9
  $region8: #{_lambda_.8} parent=0 // pred_region
    _
  $region9: #{_lambda_.8} parent=0 // pred_fallthru
    _
  // Predicated region
  $region10: #{_lambda_.8} parent=0 // pred_check
    _
  $region11: #{_lambda_.8} parent=0 // pred_check_branch
    %14 = sbr.rel (0) target = $region13
  $region12: #{_lambda_.8} parent=0 // pred_region
    _
  $region13: #{_lambda_.8} parent=0 // pred_fallthru
    _
  // Predicated region
  $region14: #{_lambda_.8} parent=0 // pred_check
    _
  $region15: #{_lambda_.8} parent=0 // pred_check_branch
    %16 = sbr.rel (0) target = $region17
  $region16: #{_lambda_.8} parent=0 // pred_region
    _
  $region17: #{_lambda_.8} parent=0 // pred_fallthru
    _
  %v18 = vld [vmem:[%s0] sm:$0xf]
  %v19 = vld [vmem:[%s0 + $0x4] sm:$0xf]
  %v20 = vld [vmem:[%s1] sm:$0xff]
  %v21 = vld [vmem:[%s1 + $0x8] sm:$0xff]
  %v22 = vld [vmem:[%s1 + $0x10] sm:$0xff]
  %v23 = vld [vmem:[%s1 + $0x18] sm:$0xff]
  %v24 = vld [vmem:[%s1 + $0x20] sm:$0xff]
  %v25 = vld [vmem:[%s1 + $0x28] sm:$0xff]
  %v26 = vld [vmem:[%s1 + $0x30] sm:$0xff]
  %v27 = vld [vmem:[%s1 + $0x38] sm:$0xff]
  %v28 = vld [vmem:[%s1 + $0x40] sm:$0xff]
  %v29 = vld [vmem:[%s1 + $0x48] sm:$0xff]
  %v30 = vld [vmem:[%s1 + $0x50] sm:$0xff]
  %v31 = vld [vmem:[%s1 + $0x58] sm:$0xff]
  %v32 = vld [vmem:[%s1 + $0x60] sm:$0xff]
  %v33 = vld [vmem:[%s1 + $0x68] sm:$0xff]
  %v34 = vld [vmem:[%s1 + $0x70] sm:$0xff]
  %v35 = vld [vmem:[%s1 + $0x78] sm:$0xff]
  %v38 = vunpack.c.l.b16 %v18
  %v39 = vunpack.c.l.b16 %v19
  %v40 = vpack.c.b16 %v39, %v38
  %v58 = vunpack.c.l.b16 %v20
  %v59 = vunpack.c.h.b16 %v20
  %v60 = vunpack.c.l.b16 %v21
  %v61 = vunpack.c.h.b16 %v21
  %v62 = vunpack.c.l.b16 %v22
  %v63 = vunpack.c.h.b16 %v22
  %v64 = vunpack.c.l.b16 %v23
  %v65 = vunpack.c.h.b16 %v23
  %v66 = vunpack.c.l.b16 %v24
  %v67 = vunpack.c.h.b16 %v24
  %v68 = vunpack.c.l.b16 %v25
  %v69 = vunpack.c.h.b16 %v25
  %v70 = vunpack.c.l.b16 %v26
  %v71 = vunpack.c.h.b16 %v26
  %v72 = vunpack.c.l.b16 %v27
  %v73 = vunpack.c.h.b16 %v27
  %v74 = vunpack.c.l.b16 %v28
  %v75 = vunpack.c.h.b16 %v28
  %v76 = vunpack.c.l.b16 %v29
  %v77 = vunpack.c.h.b16 %v29
  %v78 = vunpack.c.l.b16 %v30
  %v79 = vunpack.c.h.b16 %v30
  %v80 = vunpack.c.l.b16 %v31
  %v81 = vunpack.c.h.b16 %v31
  %v82 = vunpack.c.l.b16 %v32
  %v83 = vunpack.c.h.b16 %v32
  %v84 = vunpack.c.l.b16 %v33
  %v85 = vunpack.c.h.b16 %v33
  %v86 = vunpack.c.l.b16 %v34
  %v87 = vunpack.c.h.b16 %v34
  %v88 = vunpack.c.l.b16 %v35
  %v89 = vunpack.c.h.b16 %v35
  %v90 = vpack.c.b16 %v60, %v58
  %v91 = vpack.c.b16 %v61, %v59
  %v92 = vpack.c.b16 %v64, %v62
  %v93 = vpack.c.b16 %v65, %v63
  %v94 = vpack.c.b16 %v68, %v66
  %v95 = vpack.c.b16 %v69, %v67
  %v96 = vpack.c.b16 %v72, %v70
  %v97 = vpack.c.b16 %v73, %v71
  %v98 = vpack.c.b16 %v76, %v74
  %v99 = vpack.c.b16 %v77, %v75
  %v100 = vpack.c.b16 %v80, %v78
  %v101 = vpack.c.b16 %v81, %v79
  %v102 = vpack.c.b16 %v84, %v82
  %v103 = vpack.c.b16 %v85, %v83
  %v104 = vpack.c.b16 %v88, %v86
  %v105 = vpack.c.b16 %v89, %v87
  %122 = vmatprep.subr.bf16.mxu0 %v91
  %123 = vmatpush1.bf16.msra.mxu0 %v90
  %124 = vmatprep.subr.bf16.mxu0 %v93
  %125 = vmatpush1.bf16.msra.mxu0 %v92
  %126 = vmatprep.subr.bf16.mxu0 %v95
  %127 = vmatpush1.bf16.msra.mxu0 %v94
  %128 = vmatprep.subr.bf16.mxu0 %v97
  %129 = vmatpush1.bf16.msra.mxu0 %v96
  %130 = vmatprep.subr.bf16.mxu0 %v99
  %131 = vmatpush1.bf16.msra.mxu0 %v98
  %132 = vmatprep.subr.bf16.mxu0 %v101
  %133 = vmatpush1.bf16.msra.mxu0 %v100
  %134 = vmatprep.subr.bf16.mxu0 %v103
  %135 = vmatpush1.bf16.msra.mxu0 %v102
  %136 = vmatprep.subr.bf16.mxu0 %v105
  %137 = vmatpush1.bf16.msra.mxu0 %v104
  %138 = vmatprep.subr.bf16.mxu0 0
  %139 = vmatpush1.bf16.msra.mxu0 0
  %140 = vmatprep.subr.bf16.mxu0 0
  %141 = vmatpush1.bf16.msra.mxu0 0
  %142 = vmatprep.subr.bf16.mxu0 0
  %143 = vmatpush1.bf16.msra.mxu0 0
  %144 = vmatprep.subr.bf16.mxu0 0
  %145 = vmatpush1.bf16.msra.mxu0 0
  %146 = vmatprep.subr.bf16.mxu0 0
  %147 = vmatpush1.bf16.msra.mxu0 0
  %148 = vmatprep.subr.bf16.mxu0 0
  %149 = vmatpush1.bf16.msra.mxu0 0
  %150 = vmatprep.subr.bf16.mxu0 0
  %151 = vmatpush1.bf16.msra.mxu0 0
  %152 = vmatprep.subr.bf16.mxu0 0
  %153 = vmatpush1.bf16.msra.mxu0 0
  %154 = vmatprep.mubr.bf16.mxu0 0
  %155 = vmatmul.mubr.bf16.gmra.mrb[0].mxu0 %v40
  %v156 = vpop.f32.mrb[0].mxu0
  %v157 = vadd.f32 0.0, %v156
  %v158 = vpop.f32.mrb[0].mxu0
  %v159 = vadd.f32 0.0, %v158
  %v160 = vpop.f32.mrb[0].mxu0
  %v161 = vadd.f32 0.0, %v160
  %v162 = vpop.f32.mrb[0].mxu0
  %v163 = vadd.f32 0.0, %v162
  %164 = vdwg.mxu0
  %v165 = vadd.f32 %v157, %v161
  %v166 = vrot.slane %v165, 4
  %v167 = vadd.f32 %v165, %v166
  %v168 = vrot.slane %v167, 2
  %v169 = vadd.f32 %v167, %v168
  %v170 = vrot.slane %v169, 1
  %v171 = vadd.f32 %v169, %v170
  %v172 = vadd.f32 %v159, %v163
  %v173 = vrot.slane %v172, 4
  %v174 = vadd.f32 %v172, %v173
  %v175 = vrot.slane %v174, 2
  %v176 = vadd.f32 %v174, %v175
  %v177 = vrot.slane %v176, 1
  %v178 = vadd.f32 %v176, %v177
  %v179 = vmul.f32 %v171, 0.0625
  %v180 = vmul.f32 %v178, 0.0625
  %v181 = vmul.f32 %v157, %v157
  %v182 = vmul.f32 %v159, %v159
  %v183 = vmul.f32 %v161, %v161
  %v184 = vmul.f32 %v163, %v163
  %v185 = vadd.f32 %v181, %v183
  %v186 = vrot.slane %v185, 4
  %v187 = vadd.f32 %v185, %v186
  %v188 = vrot.slane %v187, 2
  %v189 = vadd.f32 %v187, %v188
  %v190 = vrot.slane %v189, 1
  %v191 = vadd.f32 %v189, %v190
  %v192 = vadd.f32 %v182, %v184
  %v193 = vrot.slane %v192, 4
  %v194 = vadd.f32 %v192, %v193
  %v195 = vrot.slane %v194, 2
  %v196 = vadd.f32 %v194, %v195
  %v197 = vrot.slane %v196, 1
  %v198 = vadd.f32 %v196, %v197
  %v199 = vmul.f32 %v191, 0.0625
  %v200 = vmul.f32 %v198, 0.0625
  %v201 = vmul.f32 %v179, %v179
  %v202 = vmul.f32 %v180, %v180
  %v203 = vsub.f32 %v199, %v201
  %v204 = vsub.f32 %v200, %v202
  %v205 = vmax.f32 %v203, 0.0
  %v206 = vmax.f32 %v204, 0.0
  %v207 = vsub.f32 %v157, %v179
  %v208 = vsub.f32 %v159, %v180
  %v209 = vsub.f32 %v161, %v179
  %v210 = vsub.f32 %v163, %v180
  %v211 = vadd.f32 %v205, 1e-05
  %v212 = vadd.f32 %v206, 1e-05
  %v213 = vrsqrt.pop %v211
  %v214 = vrsqrt.pop %v212
  %v215 = vmul.f32 %v207, %v213
  %v216 = vmul.f32 %v208, %v214
  %v217 = vmul.f32 %v209, %v213
  %v218 = vmul.f32 %v210, %v214
  %v219 = vld [vmem:[%s2] sm:$0x3]
  %v221 = vlaneseq
  %v222 = vshrl.u32 %v221, 7
  %v223 = vsub.s32 0, %v222
  %v224 = vrot.slane %v219, %v223
  %v225 = vlaneseq
  %v226 = vshrl.u32 %v225, 7
  %v227 = vsub.s32 1, %v226
  %v228 = vrot.slane %v219, %v227
  %v231 = vmul.f32 %v215, %v224
  %v232 = vmul.f32 %v216, %v228
  %v233 = vmul.f32 %v217, %v224
  %v234 = vmul.f32 %v218, %v228
  %v235 = vld [vmem:[%s3] sm:$0x3]
  %v237 = vlaneseq
  %v238 = vshrl.u32 %v237, 7
  %v239 = vsub.s32 0, %v238
  %v240 = vrot.slane %v235, %v239
  %v241 = vlaneseq
  %v242 = vshrl.u32 %v241, 7
  %v243 = vsub.s32 1, %v242
  %v244 = vrot.slane %v235, %v243
  %v247 = vadd.f32 %v231, %v240
  %v248 = vadd.f32 %v232, %v244
  %v249 = vadd.f32 %v233, %v240
  %v250 = vadd.f32 %v234, %v244
  %v251 = vmax.f32 %v247, 0.0
  %v252 = vmax.f32 %v248, 0.0
  %v253 = vmax.f32 %v249, 0.0
  %v254 = vmax.f32 %v250, 0.0
  %255 = vst [vmem:[%s4] sm:$0xff] %v251
  %256 = vst [vmem:[%s4 + $0x8] sm:$0xff] %v252
  %257 = vst [vmem:[%s4 + $0x10] sm:$0xff] %v253
  %258 = vst [vmem:[%s4 + $0x18] sm:$0xff] %v254
  // Predicated region
  $region18: #{_lambda_.8} parent=0 // pred_check
    _
  $region19: #{_lambda_.8} parent=0 // pred_check_branch
    %260 = sbr.rel (0) target = $region21
  $region20: #{_lambda_.8} parent=0 // pred_region
    _
  $region21: #{_lambda_.8} parent=0 // pred_fallthru
    _
  // Predicated region
  $region22: #{_lambda_.8} parent=0 // pred_check
    _
  $region23: #{_lambda_.8} parent=0 // pred_check_branch
    %262 = sbr.rel (0) target = $region25
  $region24: #{_lambda_.8} parent=0 // pred_region
    _
  $region25: #{_lambda_.8} parent=0 // pred_fallthru
    _

// kernel: _lambda_.9
$region0: #{_lambda_.9}
  #allocation0 [shape = 'u32[]', space=smem, size = 0x4, offset = 0x4, fixed_abs, tag = 'smem constant byte address 0x4 - core index']
  #allocation1 [shape = 'u32[144,128]{1,0:T(1,128)}', space=vmem, size = 0x12000, scoped, tag = 'internal scratch']
  %s0 = inlined_call_operand.vmem [shape: bf16[16,256], index: 0, kind: input, shape index: {}]
  %s1 = inlined_call_operand.vmem [shape: bf16[256,896], index: 1, kind: input, shape index: {}]
  %s2 = inlined_call_operand.vmem [shape: f32[1,896], index: 2, kind: input, shape index: {}]
  %s3 = inlined_call_operand.vmem [shape: f32[1,896], index: 3, kind: input, shape index: {}]
  %s4 = inlined_call_operand.vmem [shape: f32[16,896], index: 4, kind: output, shape index: {}]
  %s5 = sld [smem:[#allocation0]]
  $region124: #{_lambda_.9} parent=0
    _
  %s7 = ssub.s32 1, %s5
  %s8 = scalar_select 0, %s7, %s5
  $region1: #{_lambda_.9} parent=0
    #allocation2 [shape = 'u8[131072]{0}', space=vmem, size = 0x20000, scoped, tag = 'input window, operand 1']
    #allocation3 [shape = 'u8[16384]{0}', space=vmem, size = 0x4000, scoped, tag = 'output window, operand 0']
    loop: start=0, step=1, limit=9
    $region2: #{_lambda_.9} parent=1 // loop_pre_header
      _
    $region3: #{_lambda_.9} parent=1 // loop_header
      %s10 = sphi 0, %s14
      %p11 = scmp.ge.s32.totalorder %s10, 9
      %s18 = sphi 0, %s18
      %s20 = sphi 0, %s18
      %s21 = sphi 0, %s20
      %s35 = sphi 0, %s21
      %s41 = sphi 0, %s43
      %s44 = sphi 0, %s41
      %s45 = sphi 0, %s44
      %s61 = sphi 0, %s45
      %s67 = sphi 0, %s69
      %s70 = sphi 0, %s67
      %s71 = sphi 0, %s70
      %s87 = sphi 0, %s71
      %s93 = sphi 0, %s95
      %s96 = sphi 0, %s93
      %s97 = sphi 0, %s96
      %s113 = sphi 0, %s97
      %s119 = sphi 0, %s121
      %s122 = sphi 0, %s119
      %s123 = sphi 0, %s122
      %s139 = sphi 0, %s123
    $region4: #{_lambda_.9} parent=1 // loop_header_branch
      %13 = sbr.rel (%p11) target = $region8
    $region5: #{_lambda_.9} parent=1 // loop_body
      %s15 = ssub.s32 %s10, 1
      %s16 = ssub.s32 %s10, 2
      %s17 = sadd.s32 %s10, 1
      %s19 = sadd.s32 %s18, 1
      %p22 = scmp.eq.s32.totalorder %s10, 6
      %p23 = scmp.ne.s32.totalorder %s18, %s20
      %p24 = scmp.eq.s32.totalorder %s10, 0
      %p25 = por %p23, %p24
      %p26 = scmp.ne.s32.totalorder %s18, %s20
      %p27 = scmp.eq.s32.totalorder %s15, 6
      %p28 = por %p26, %p27
      %p29 = scmp.ne.s32.totalorder %s20, %s21
      %p30 = scmp.eq.s32.totalorder %s15, 0
      %p31 = por %p29, %p30
      %p32 = scmp.ne.s32.totalorder %s20, %s21
      %p33 = scmp.eq.s32.totalorder %s16, 6
      %p34 = por %p32, %p33
      %p36 = scmp.ne.s32.totalorder %s21, %s35
      %p37 = scmp.eq.s32.totalorder %s16, 0
      %p38 = por %p36, %p37
      %s39 = ssub.s32 %s10, %s17
      %p40 = scmp.eq.s32.totalorder %s39, 0
      %s42 = sadd.s32 %s41, 1
      %s43 = scalar_select %p40, %s41, %s42
      %p46 = pneg %p40
      %p47 = scmp.eq.s32.totalorder %s10, 6
      %p48 = por %p46, %p47
      %p49 = scmp.ne.s32.totalorder %s41, %s44
      %p50 = scmp.eq.s32.totalorder %s10, 0
      %p51 = por %p49, %p50
      %p52 = scmp.ne.s32.totalorder %s41, %s44
      %p53 = scmp.eq.s32.totalorder %s15, 6
      %p54 = por %p52, %p53
      %p55 = scmp.ne.s32.totalorder %s44, %s45
      %p56 = scmp.eq.s32.totalorder %s15, 0
      %p57 = por %p55, %p56
      %p58 = scmp.ne.s32.totalorder %s44, %s45
      %p59 = scmp.eq.s32.totalorder %s16, 6
      %p60 = por %p58, %p59
      %p62 = scmp.ne.s32.totalorder %s45, %s61
      %p63 = scmp.eq.s32.totalorder %s16, 0
      %p64 = por %p62, %p63
      %s65 = ssub.s32 %s10, %s17
      %p66 = scmp.eq.s32.totalorder %s65, 0
      %s68 = sadd.s32 %s67, 1
      %s69 = scalar_select %p66, %s67, %s68
      %p72 = pneg %p66
      %p73 = scmp.eq.s32.totalorder %s10, 6
      %p74 = por %p72, %p73
      %p75 = scmp.ne.s32.totalorder %s67, %s70
      %p76 = scmp.eq.s32.totalorder %s10, 0
      %p77 = por %p75, %p76
      %p78 = scmp.ne.s32.totalorder %s67, %s70
      %p79 = scmp.eq.s32.totalorder %s15, 6
      %p80 = por %p78, %p79
      %p81 = scmp.ne.s32.totalorder %s70, %s71
      %p82 = scmp.eq.s32.totalorder %s15, 0
      %p83 = por %p81, %p82
      %p84 = scmp.ne.s32.totalorder %s70, %s71
      %p85 = scmp.eq.s32.totalorder %s16, 6
      %p86 = por %p84, %p85
      %p88 = scmp.ne.s32.totalorder %s71, %s87
      %p89 = scmp.eq.s32.totalorder %s16, 0
      %p90 = por %p88, %p89
      %s91 = ssub.s32 %s10, %s17
      %p92 = scmp.eq.s32.totalorder %s91, 0
      %s94 = sadd.s32 %s93, 1
      %s95 = scalar_select %p92, %s93, %s94
      %p98 = pneg %p92
      %p99 = scmp.eq.s32.totalorder %s10, 6
      %p100 = por %p98, %p99
      %p101 = scmp.ne.s32.totalorder %s93, %s96
      %p102 = scmp.eq.s32.totalorder %s10, 0
      %p103 = por %p101, %p102
      %p104 = scmp.ne.s32.totalorder %s93, %s96
      %p105 = scmp.eq.s32.totalorder %s15, 6
      %p106 = por %p104, %p105
      %p107 = scmp.ne.s32.totalorder %s96, %s97
      %p108 = scmp.eq.s32.totalorder %s15, 0
      %p109 = por %p107, %p108
      %p110 = scmp.ne.s32.totalorder %s96, %s97
      %p111 = scmp.eq.s32.totalorder %s16, 6
      %p112 = por %p110, %p111
      %p114 = scmp.ne.s32.totalorder %s97, %s113
      %p115 = scmp.eq.s32.totalorder %s16, 0
      %p116 = por %p114, %p115
      %s117 = ssub.s32 %s10, %s17
      %p118 = scmp.eq.s32.totalorder %s117, 0
      %s120 = sadd.s32 %s119, 1
      %s121 = scalar_select %p118, %s119, %s120
      %p124 = pneg %p118
      %p125 = scmp.eq.s32.totalorder %s10, 6
      %p126 = por %p124, %p125
      %p127 = scmp.ne.s32.totalorder %s119, %s122
      %p128 = scmp.eq.s32.totalorder %s10, 0
      %p129 = por %p127, %p128
      %p130 = scmp.ne.s32.totalorder %s119, %s122
      %p131 = scmp.eq.s32.totalorder %s15, 6
      %p132 = por %p130, %p131
      %p133 = scmp.ne.s32.totalorder %s122, %s123
      %p134 = scmp.eq.s32.totalorder %s15, 0
      %p135 = por %p133, %p134
      %p136 = scmp.ne.s32.totalorder %s122, %s123
      %p137 = scmp.eq.s32.totalorder %s16, 6
      %p138 = por %p136, %p137
      %p140 = scmp.ne.s32.totalorder %s123, %s139
      %p141 = scmp.eq.s32.totalorder %s16, 0
      %p142 = por %p140, %p141
      %p143 = scmp.le.s32.totalorder 1, %s10
      %p144 = scmp.lt.s32.totalorder %s10, 8
      %p145 = pnand %p143, %p144
      %p146 = pneg %p145
      // Predicated region
      $region9: #{_lambda_.9} parent=5 // pred_check
        _
      $region10: #{_lambda_.9} parent=5 // pred_check_branch
        %148 = sbr.rel (%p145) target = $region12
      $region11: #{_lambda_.9} parent=5 // pred_region
        %s149 = ssub.s32 %s10, 1
        // Predicated region
        $region13: #{_lambda_.9} parent=11 // pred_check
          %p150 = pneg %p31
        $region14: #{_lambda_.9} parent=11 // pred_check_branch
          %152 = sbr.rel (%p150) target = $region16
        $region15: #{_lambda_.9} parent=11 // pred_region
          _
        $region16: #{_lambda_.9} parent=11 // pred_fallthru
          _
      $region12: #{_lambda_.9} parent=5 // pred_fallthru
        _
      %p153 = scmp.lt.s32.totalorder %s10, 7
      // Predicated region
      $region17: #{_lambda_.9} parent=5 // pred_check
        %p154 = pneg %p153
      $region18: #{_lambda_.9} parent=5 // pred_check_branch
        %156 = sbr.rel (%p154) target = $region20
      $region19: #{_lambda_.9} parent=5 // pred_region
        // Predicated region
        $region21: #{_lambda_.9} parent=19 // pred_check
          %p157 = pneg %p51
        $region22: #{_lambda_.9} parent=19 // pred_check_branch
          %159 = sbr.rel (%p157) target = $region24
        $region23: #{_lambda_.9} parent=19 // pred_region
          %s160 = sand.u32 %s41, 1
          %s161 = sand.u32 %s41, 1
          %s162 = smul.addr %s161, 128
          %s163 = scalar_lea.vmem [#allocation2], %s162
          %s164 = smul.addr %s10, 4
          %s165 = scalar_lea.vmem %s1, %s164
          // Predicated region
          $region25: #{_lambda_.9} parent=23 // pred_check
            _
          $region26: #{_lambda_.9} parent=23 // pred_check_branch
            %167 = sbr.rel (0) target = $region28
          $region27: #{_lambda_.9} parent=23 // pred_region
            // Predicated region
            $region29: #{_lambda_.9} parent=27 // pred_check
              _
            $region30: #{_lambda_.9} parent=27 // pred_check_branch
              %169 = sbr.rel target = $region32
            $region31: #{_lambda_.9} parent=27 // pred_region
              // Predicated region
              $region44: #{_lambda_.9} parent=31 // pred_check
                _
              $region45: #{_lambda_.9} parent=31 // pred_check_branch
                %246 = sbr.rel (0) target = $region47
              $region46: #{_lambda_.9} parent=31 // pred_region
                loop: start=0, step=1, limit=1
                $region48: #{_lambda_.9} parent=46 // loop_pre_header
                  _
                $region49: #{_lambda_.9} parent=46 // loop_header
                  %s248 = sphi 0, %s252
                  %p249 = scmp.ge.s32.totalorder %s248, 1
                  %s253 = sphi %s165, %s165
                  %s254 = sphi %s163, %s163
                $region50: #{_lambda_.9} parent=46 // loop_header_branch
                  %251 = sbr.rel (%p249) target = $region54
                $region51: #{_lambda_.9} parent=46 // loop_body
                  _
                $region52: #{_lambda_.9} parent=46 // loop_footer
                  %s252 = sadd.s32 1, %s248
                $region53: #{_lambda_.9} parent=46 // loop_footer_branch
                  %247 = sbr.rel target = $region49
                $region54: #{_lambda_.9} parent=46 // loop_exit
                  _
                loop: start=0, step=1, limit=1
                $region55: #{_lambda_.9} parent=46 // loop_pre_header
                  _
                $region56: #{_lambda_.9} parent=46 // loop_header
                  %s257 = sphi 0, %s261
                  %p258 = scmp.ge.s32.totalorder %s257, 1
                  %s262 = sphi %s165, %s165
                  %s263 = sphi %s163, %s163
                $region57: #{_lambda_.9} parent=46 // loop_header_branch
                  %260 = sbr.rel (%p258) target = $region61
                $region58: #{_lambda_.9} parent=46 // loop_body
                  %v264 = vld [vmem:[%s262] sm:$0xf]
                  %265 = vst [vmem:[%s263] sm:$0xf] %v264
                  %v266 = vld [vmem:[%s262 + $0x1c] sm:$0xf]
                  %267 = vst [vmem:[%s263 + $0x4] sm:$0xf] %v266
                  %v268 = vld [vmem:[%s262 + $0x38] sm:$0xf]
                  %269 = vst [vmem:[%s263 + $0x8] sm:$0xf] %v268
                  %v270 = vld [vmem:[%s262 + $0x54] sm:$0xf]
                  %271 = vst [vmem:[%s263 + $0xc] sm:$0xf] %v270
                  %v272 = vld [vmem:[%s262 + $0x70] sm:$0xf]
                  %273 = vst [vmem:[%s263 + $0x10] sm:$0xf] %v272
                  %v274 = vld [vmem:[%s262 + $0x8c] sm:$0xf]
                  %275 = vst [vmem:[%s263 + $0x14] sm:$0xf] %v274
                  %v276 = vld [vmem:[%s262 + $0xa8] sm:$0xf]
                  %277 = vst [vmem:[%s263 + $0x18] sm:$0xf] %v276
                  %v278 = vld [vmem:[%s262 + $0xc4] sm:$0xf]
                  %279 = vst [vmem:[%s263 + $0x1c] sm:$0xf] %v278
                  %v280 = vld [vmem:[%s262 + $0xe0] sm:$0xf]
                  %281 = vst [vmem:[%s263 + $0x20] sm:$0xf] %v280
                  %v282 = vld [vmem:[%s262 + $0xfc] sm:$0xf]
                  %283 = vst [vmem:[%s263 + $0x24] sm:$0xf] %v282
                  %v284 = vld [vmem:[%s262 + $0x118] sm:$0xf]
                  %285 = vst [vmem:[%s263 + $0x28] sm:$0xf] %v284
                  %v286 = vld [vmem:[%s262 + $0x134] sm:$0xf]
                  %287 = vst [vmem:[%s263 + $0x2c] sm:$0xf] %v286
                  %v288 = vld [vmem:[%s262 + $0x150] sm:$0xf]
                  %289 = vst [vmem:[%s263 + $0x30] sm:$0xf] %v288
                  %v290 = vld [vmem:[%s262 + $0x16c] sm:$0xf]
                  %291 = vst [vmem:[%s263 + $0x34] sm:$0xf] %v290
                  %v292 = vld [vmem:[%s262 + $0x188] sm:$0xf]
                  %293 = vst [vmem:[%s263 + $0x38] sm:$0xf] %v292
                  %v294 = vld [vmem:[%s262 + $0x1a4] sm:$0xf]
                  %295 = vst [vmem:[%s263 + $0x3c] sm:$0xf] %v294
                  %v296 = vld [vmem:[%s262 + $0x1c0] sm:$0xf]
                  %297 = vst [vmem:[%s263 + $0x40] sm:$0xf] %v296
                  %v298 = vld [vmem:[%s262 + $0x1dc] sm:$0xf]
                  %299 = vst [vmem:[%s263 + $0x44] sm:$0xf] %v298
                  %v300 = vld [vmem:[%s262 + $0x1f8] sm:$0xf]
                  %301 = vst [vmem:[%s263 + $0x48] sm:$0xf] %v300
                  %v302 = vld [vmem:[%s262 + $0x214] sm:$0xf]
                  %303 = vst [vmem:[%s263 + $0x4c] sm:$0xf] %v302
                  %v304 = vld [vmem:[%s262 + $0x230] sm:$0xf]
                  %305 = vst [vmem:[%s263 + $0x50] sm:$0xf] %v304
                  %v306 = vld [vmem:[%s262 + $0x24c] sm:$0xf]
                  %307 = vst [vmem:[%s263 + $0x54] sm:$0xf] %v306
                  %v308 = vld [vmem:[%s262 + $0x268] sm:$0xf]
                  %309 = vst [vmem:[%s263 + $0x58] sm:$0xf] %v308
                  %v310 = vld [vmem:[%s262 + $0x284] sm:$0xf]
                  %311 = vst [vmem:[%s263 + $0x5c] sm:$0xf] %v310
                  %v312 = vld [vmem:[%s262 + $0x2a0] sm:$0xf]
                  %313 = vst [vmem:[%s263 + $0x60] sm:$0xf] %v312
                  %v314 = vld [vmem:[%s262 + $0x2bc] sm:$0xf]
                  %315 = vst [vmem:[%s263 + $0x64] sm:$0xf] %v314
                  %v316 = vld [vmem:[%s262 + $0x2d8] sm:$0xf]
                  %317 = vst [vmem:[%s263 + $0x68] sm:$0xf] %v316
                  %v318 = vld [vmem:[%s262 + $0x2f4] sm:$0xf]
                  %319 = vst [vmem:[%s263 + $0x6c] sm:$0xf] %v318
                  %v320 = vld [vmem:[%s262 + $0x310] sm:$0xf]
                  %321 = vst [vmem:[%s263 + $0x70] sm:$0xf] %v320
                  %v322 = vld [vmem:[%s262 + $0x32c] sm:$0xf]
                  %323 = vst [vmem:[%s263 + $0x74] sm:$0xf] %v322
                  %v324 = vld [vmem:[%s262 + $0x348] sm:$0xf]
                  %325 = vst [vmem:[%s263 + $0x78] sm:$0xf] %v324
                  %v326 = vld [vmem:[%s262 + $0x364] sm:$0xf]
                  %327 = vst [vmem:[%s263 + $0x7c] sm:$0xf] %v326
                $region59: #{_lambda_.9} parent=46 // loop_footer
                  %s261 = sadd.s32 1, %s257
                $region60: #{_lambda_.9} parent=46 // loop_footer_branch
                  %256 = sbr.rel target = $region56
                $region61: #{_lambda_.9} parent=46 // loop_exit
                  _
              $region47: #{_lambda_.9} parent=31 // pred_fallthru
                _
            $region32: #{_lambda_.9} parent=27 // pred_fallthru
              _
            // Predicated region
            $region33: #{_lambda_.9} parent=27 // pred_check
              _
            $region34: #{_lambda_.9} parent=27 // pred_check_branch
              %171 = sbr.rel (0) target = $region36
            $region35: #{_lambda_.9} parent=27 // pred_region
              loop: start=0, step=1, limit=1
              $region37: #{_lambda_.9} parent=35 // loop_pre_header
                _
              $region38: #{_lambda_.9} parent=35 // loop_header
                %s174 = sphi 0, %s178
                %p175 = scmp.ge.s32.totalorder %s174, 1
                %s179 = sphi %s165, %s165
                %s180 = sphi %s163, %s163
              $region39: #{_lambda_.9} parent=35 // loop_header_branch
                %177 = sbr.rel (%p175) target = $region43
              $region40: #{_lambda_.9} parent=35 // loop_body
                %v181 = vld [vmem:[%s179] sm:$0xf]
                %182 = vst [vmem:[%s180] sm:$0xf] %v181
                %v183 = vld [vmem:[%s179 + $0x1c] sm:$0xf]
                %184 = vst [vmem:[%s180 + $0x4] sm:$0xf] %v183
                %v185 = vld [vmem:[%s179 + $0x38] sm:$0xf]
                %186 = vst [vmem:[%s180 + $0x8] sm:$0xf] %v185
                %v187 = vld [vmem:[%s179 + $0x54] sm:$0xf]
                %188 = vst [vmem:[%s180 + $0xc] sm:$0xf] %v187
                %v189 = vld [vmem:[%s179 + $0x70] sm:$0xf]
                %190 = vst [vmem:[%s180 + $0x10] sm:$0xf] %v189
                %v191 = vld [vmem:[%s179 + $0x8c] sm:$0xf]
                %192 = vst [vmem:[%s180 + $0x14] sm:$0xf] %v191
                %v193 = vld [vmem:[%s179 + $0xa8] sm:$0xf]
                %194 = vst [vmem:[%s180 + $0x18] sm:$0xf] %v193
                %v195 = vld [vmem:[%s179 + $0xc4] sm:$0xf]
                %196 = vst [vmem:[%s180 + $0x1c] sm:$0xf] %v195
                %v197 = vld [vmem:[%s179 + $0xe0] sm:$0xf]
                %198 = vst [vmem:[%s180 + $0x20] sm:$0xf] %v197
                %v199 = vld [vmem:[%s179 + $0xfc] sm:$0xf]
                %200 = vst [vmem:[%s180 + $0x24] sm:$0xf] %v199
                %v201 = vld [vmem:[%s179 + $0x118] sm:$0xf]
                %202 = vst [vmem:[%s180 + $0x28] sm:$0xf] %v201
                %v203 = vld [vmem:[%s179 + $0x134] sm:$0xf]
                %204 = vst [vmem:[%s180 + $0x2c] sm:$0xf] %v203
                %v205 = vld [vmem:[%s179 + $0x150] sm:$0xf]
                %206 = vst [vmem:[%s180 + $0x30] sm:$0xf] %v205
                %v207 = vld [vmem:[%s179 + $0x16c] sm:$0xf]
                %208 = vst [vmem:[%s180 + $0x34] sm:$0xf] %v207
                %v209 = vld [vmem:[%s179 + $0x188] sm:$0xf]
                %210 = vst [vmem:[%s180 + $0x38] sm:$0xf] %v209
                %v211 = vld [vmem:[%s179 + $0x1a4] sm:$0xf]
                %212 = vst [vmem:[%s180 + $0x3c] sm:$0xf] %v211
                %v213 = vld [vmem:[%s179 + $0x1c0] sm:$0xf]
                %214 = vst [vmem:[%s180 + $0x40] sm:$0xf] %v213
                %v215 = vld [vmem:[%s179 + $0x1dc] sm:$0xf]
                %216 = vst [vmem:[%s180 + $0x44] sm:$0xf] %v215
                %v217 = vld [vmem:[%s179 + $0x1f8] sm:$0xf]
                %218 = vst [vmem:[%s180 + $0x48] sm:$0xf] %v217
                %v219 = vld [vmem:[%s179 + $0x214] sm:$0xf]
                %220 = vst [vmem:[%s180 + $0x4c] sm:$0xf] %v219
                %v221 = vld [vmem:[%s179 + $0x230] sm:$0xf]
                %222 = vst [vmem:[%s180 + $0x50] sm:$0xf] %v221
                %v223 = vld [vmem:[%s179 + $0x24c] sm:$0xf]
                %224 = vst [vmem:[%s180 + $0x54] sm:$0xf] %v223
                %v225 = vld [vmem:[%s179 + $0x268] sm:$0xf]
                %226 = vst [vmem:[%s180 + $0x58] sm:$0xf] %v225
                %v227 = vld [vmem:[%s179 + $0x284] sm:$0xf]
                %228 = vst [vmem:[%s180 + $0x5c] sm:$0xf] %v227
                %v229 = vld [vmem:[%s179 + $0x2a0] sm:$0xf]
                %230 = vst [vmem:[%s180 + $0x60] sm:$0xf] %v229
                %v231 = vld [vmem:[%s179 + $0x2bc] sm:$0xf]
                %232 = vst [vmem:[%s180 + $0x64] sm:$0xf] %v231
                %v233 = vld [vmem:[%s179 + $0x2d8] sm:$0xf]
                %234 = vst [vmem:[%s180 + $0x68] sm:$0xf] %v233
                %v235 = vld [vmem:[%s179 + $0x2f4] sm:$0xf]
                %236 = vst [vmem:[%s180 + $0x6c] sm:$0xf] %v235
                %v237 = vld [vmem:[%s179 + $0x310] sm:$0xf]
                %238 = vst [vmem:[%s180 + $0x70] sm:$0xf] %v237
                %v239 = vld [vmem:[%s179 + $0x32c] sm:$0xf]
                %240 = vst [vmem:[%s180 + $0x74] sm:$0xf] %v239
                %v241 = vld [vmem:[%s179 + $0x348] sm:$0xf]
                %242 = vst [vmem:[%s180 + $0x78] sm:$0xf] %v241
                %v243 = vld [vmem:[%s179 + $0x364] sm:$0xf]
                %244 = vst [vmem:[%s180 + $0x7c] sm:$0xf] %v243
              $region41: #{_lambda_.9} parent=35 // loop_footer
                %s178 = sadd.s32 1, %s174
              $region42: #{_lambda_.9} parent=35 // loop_footer_branch
                %173 = sbr.rel target = $region38
              $region43: #{_lambda_.9} parent=35 // loop_exit
                _
            $region36: #{_lambda_.9} parent=27 // pred_fallthru
              _
          $region28: #{_lambda_.9} parent=23 // pred_fallthru
            _
          %328 = vnop
        $region24: #{_lambda_.9} parent=19 // pred_fallthru
          _
        // Predicated region
        $region62: #{_lambda_.9} parent=19 // pred_check
          %p329 = pneg %p77
        $region63: #{_lambda_.9} parent=19 // pred_check_branch
          %331 = sbr.rel (%p329) target = $region65
        $region64: #{_lambda_.9} parent=19 // pred_region
          %p332 = scmp.lt.s32.totalorder %s10, 6
          %s333 = scalar_select %p332, %s10, 6
          %s334 = scalar_lea.vmem %s2, %s333
        $region65: #{_lambda_.9} parent=19 // pred_fallthru
          _
        // Predicated region
        $region66: #{_lambda_.9} parent=19 // pred_check
          %p335 = pneg %p103
        $region67: #{_lambda_.9} parent=19 // pred_check_branch
          %337 = sbr.rel (%p335) target = $region69
        $region68: #{_lambda_.9} parent=19 // pred_region
          %p338 = scmp.lt.s32.totalorder %s10, 6
          %s339 = scalar_select %p338, %s10, 6
          %s340 = scalar_lea.vmem %s3, %s339
        $region69: #{_lambda_.9} parent=19 // pred_fallthru
          _
      $region20: #{_lambda_.9} parent=5 // pred_fallthru
        _
      %p341 = scmp.le.s32.totalorder 1, %s10
      %p342 = scmp.lt.s32.totalorder %s10, 8
      %p343 = pnand %p341, %p342
      %p344 = pneg %p343
      // Predicated region
      $region70: #{_lambda_.9} parent=5 // pred_check
        _
      $region71: #{_lambda_.9} parent=5 // pred_check_branch
        %346 = sbr.rel (%p343) target = $region73
      $region72: #{_lambda_.9} parent=5 // pred_region
        %s347 = ssub.s32 %s10, 1
        %s348 = sand.u32 %s44, 1
        %s349 = sand.u32 %s44, 1
        %s350 = smul.addr %s349, 128
        %s351 = scalar_lea.vmem [#allocation2], %s350
        // Predicated region
        $region74: #{_lambda_.9} parent=72 // pred_check
          %p352 = pneg %p57
        $region75: #{_lambda_.9} parent=72 // pred_check_branch
          %354 = sbr.rel (%p352) target = $region77
        $region76: #{_lambda_.9} parent=72 // pred_region
          _
        $region77: #{_lambda_.9} parent=72 // pred_fallthru
          _
        %p355 = pneg %p31
        %p356 = pneg %p28
        %s357 = sand.u32 %s44, 1
        %s358 = sand.u32 %s44, 1
        %s359 = smul.addr %s358, 128
        %s360 = scalar_lea.vmem [#allocation2], %s359
        %p361 = pneg %p57
        %p362 = pneg %p54
        %p363 = scmp.lt.s32.totalorder %s15, 6
        %s364 = scalar_select %p363, %s15, 6
        %s365 = scalar_lea.vmem %s2, %s364
        %p366 = pneg %p83
        %p367 = pneg %p80
        %p368 = scmp.lt.s32.totalorder %s15, 6
        %s369 = scalar_select %p368, %s15, 6
        %s370 = scalar_lea.vmem %s3, %s369
        %p371 = pneg %p109
        %p372 = pneg %p106
        %p373 = pneg %p135
        %p374 = pneg %p132
        %s375 = sand.u32 %s122, 1
        %s376 = sand.u32 %s122, 1
        %s377 = smul.addr %s376, 16
        %s378 = scalar_lea.vmem [#allocation3], %s377
        %p379 = scmp.lt.s32.totalorder %s15, 6
        %s380 = scalar_select %p379, %s15, 6
        %s381 = scalar_lea.vmem %s2, %s380
        %p382 = scmp.lt.s32.totalorder %s15, 6
        %s383 = scalar_select %p382, %s15, 6
        %s384 = scalar_lea.vmem %s3, %s383
        %v386 = vld [vmem:[%s0] sm:$0xff]
        %v387 = vld [vmem:[%s0 + $0x8] sm:$0xff]
        %v388 = vld [vmem:[%s351] sm:$0xf]
        %v389 = vld [vmem:[%s351 + $0x4] sm:$0xf]
        %v390 = vld [vmem:[%s351 + $0x8] sm:$0xf]
        %v391 = vld [vmem:[%s351 + $0xc] sm:$0xf]
        %v392 = vld [vmem:[%s351 + $0x10] sm:$0xf]
        %v393 = vld [vmem:[%s351 + $0x14] sm:$0xf]
        %v394 = vld [vmem:[%s351 + $0x18] sm:$0xf]
        %v395 = vld [vmem:[%s351 + $0x1c] sm:$0xf]
        %v396 = vld [vmem:[%s351 + $0x20] sm:$0xf]
        %v397 = vld [vmem:[%s351 + $0x24] sm:$0xf]
        %v398 = vld [vmem:[%s351 + $0x28] sm:$0xf]
        %v399 = vld [vmem:[%s351 + $0x2c] sm:$0xf]
        %v400 = vld [vmem:[%s351 + $0x30] sm:$0xf]
        %v401 = vld [vmem:[%s351 + $0x34] sm:$0xf]
        %v402 = vld [vmem:[%s351 + $0x38] sm:$0xf]
        %v403 = vld [vmem:[%s351 + $0x3c] sm:$0xf]
        %v404 = vld [vmem:[%s351 + $0x40] sm:$0xf]
        %v405 = vld [vmem:[%s351 + $0x44] sm:$0xf]
        %v406 = vld [vmem:[%s351 + $0x48] sm:$0xf]
        %v407 = vld [vmem:[%s351 + $0x4c] sm:$0xf]
        %v408 = vld [vmem:[%s351 + $0x50] sm:$0xf]
        %v409 = vld [vmem:[%s351 + $0x54] sm:$0xf]
        %v410 = vld [vmem:[%s351 + $0x58] sm:$0xf]
        %v411 = vld [vmem:[%s351 + $0x5c] sm:$0xf]
        %v412 = vld [vmem:[%s351 + $0x60] sm:$0xf]
        %v413 = vld [vmem:[%s351 + $0x64] sm:$0xf]
        %v414 = vld [vmem:[%s351 + $0x68] sm:$0xf]
        %v415 = vld [vmem:[%s351 + $0x6c] sm:$0xf]
        %v416 = vld [vmem:[%s351 + $0x70] sm:$0xf]
        %v417 = vld [vmem:[%s351 + $0x74] sm:$0xf]
        %v418 = vld [vmem:[%s351 + $0x78] sm:$0xf]
        %v419 = vld [vmem:[%s351 + $0x7c] sm:$0xf]
        %v422 = vunpack.c.l.b16 %v386
        %v423 = vunpack.c.h.b16 %v386
        %v424 = vunpack.c.l.b16 %v387
        %v425 = vunpack.c.h.b16 %v387
        %v426 = vpack.c.b16 %v424, %v422
        %v427 = vpack.c.b16 %v425, %v423
        %v462 = vunpack.c.l.b16 %v388
        %v463 = vunpack.c.l.b16 %v389
        %v464 = vunpack.c.l.b16 %v390
        %v465 = vunpack.c.l.b16 %v391
        %v466 = vunpack.c.l.b16 %v392
        %v467 = vunpack.c.l.b16 %v393
        %v468 = vunpack.c.l.b16 %v394
        %v469 = vunpack.c.l.b16 %v395
        %v470 = vunpack.c.l.b16 %v396
        %v471 = vunpack.c.l.b16 %v397
        %v472 = vunpack.c.l.b16 %v398
        %v473 = vunpack.c.l.b16 %v399
        %v474 = vunpack.c.l.b16 %v400
        %v475 = vunpack.c.l.b16 %v401
        %v476 = vunpack.c.l.b16 %v402
        %v477 = vunpack.c.l.b16 %v403
        %v478 = vunpack.c.l.b16 %v404
        %v479 = vunpack.c.l.b16 %v405
        %v480 = vunpack.c.l.b16 %v406
        %v481 = vunpack.c.l.b16 %v407
        %v482 = vunpack.c.l.b16 %v408
        %v483 = vunpack.c.l.b16 %v409
        %v484 = vunpack.c.l.b16 %v410
        %v485 = vunpack.c.l.b16 %v411
        %v486 = vunpack.c.l.b16 %v412
        %v487 = vunpack.c.l.b16 %v413
        %v488 = vunpack.c.l.b16 %v414
        %v489 = vunpack.c.l.b16 %v415
        %v490 = vunpack.c.l.b16 %v416
        %v491 = vunpack.c.l.b16 %v417
        %v492 = vunpack.c.l.b16 %v418
        %v493 = vunpack.c.l.b16 %v419
        %v494 = vpack.c.b16 %v463, %v462
        %v495 = vpack.c.b16 %v465, %v464
        %v496 = vpack.c.b16 %v467, %v466
        %v497 = vpack.c.b16 %v469, %v468
        %v498 = vpack.c.b16 %v471, %v470
        %v499 = vpack.c.b16 %v473, %v472
        %v500 = vpack.c.b16 %v475, %v474
        %v501 = vpack.c.b16 %v477, %v476
        %v502 = vpack.c.b16 %v479, %v478
        %v503 = vpack.c.b16 %v481, %v480
        %v504 = vpack.c.b16 %v483, %v482
        %v505 = vpack.c.b16 %v485, %v484
        %v506 = vpack.c.b16 %v487, %v486
        %v507 = vpack.c.b16 %v489, %v488
        %v508 = vpack.c.b16 %v491, %v490
        %v509 = vpack.c.b16 %v493, %v492
        %526 = vmatprep.subr.bf16.mxu0 0
        %527 = vmatpush1.bf16.msra.mxu0 %v494
        %528 = vmatprep.subr.bf16.mxu0 0
        %529 = vmatpush1.bf16.msra.mxu0 %v495
        %530 = vmatprep.subr.bf16.mxu0 0
        %531 = vmatpush1.bf16.msra.mxu0 %v496
        %532 = vmatprep.subr.bf16.mxu0 0
        %533 = vmatpush1.bf16.msra.mxu0 %v497
        %534 = vmatprep.subr.bf16.mxu0 0
        %535 = vmatpush1.bf16.msra.mxu0 %v498
        %536 = vmatprep.subr.bf16.mxu0 0
        %537 = vmatpush1.bf16.msra.mxu0 %v499
        %538 = vmatprep.subr.bf16.mxu0 0
        %539 = vmatpush1.bf16.msra.mxu0 %v500
        %540 = vmatprep.subr.bf16.mxu0 0
        %541 = vmatpush1.bf16.msra.mxu0 %v501
        %542 = vmatprep.subr.bf16.mxu0 0
        %543 = vmatpush1.bf16.msra.mxu0 %v502
        %544 = vmatprep.subr.bf16.mxu0 0
        %545 = vmatpush1.bf16.msra.mxu0 %v503
        %546 = vmatprep.subr.bf16.mxu0 0
        %547 = vmatpush1.bf16.msra.mxu0 %v504
        %548 = vmatprep.subr.bf16.mxu0 0
        %549 = vmatpush1.bf16.msra.mxu0 %v505
        %550 = vmatprep.subr.bf16.mxu0 0
        %551 = vmatpush1.bf16.msra.mxu0 %v506
        %552 = vmatprep.subr.bf16.mxu0 0
        %553 = vmatpush1.bf16.msra.mxu0 %v507
        %554 = vmatprep.subr.bf16.mxu0 0
        %555 = vmatpush1.bf16.msra.mxu0 %v508
        %556 = vmatprep.subr.bf16.mxu0 0
        %557 = vmatpush1.bf16.msra.mxu0 %v509
        %558 = vmatprep.mubr.bf16.mxu0 %v427
        %559 = vmatmul.mubr.bf16.gmra.mrb[0].mxu0 %v426
        %v560 = vpop.f32.mrb[0].mxu0
        %v561 = vadd.f32 0.0, %v560
        %v562 = vpop.f32.mrb[0].mxu0
        %v563 = vpop.f32.mrb[0].mxu0
        %v564 = vadd.f32 0.0, %v563
        %v565 = vpop.f32.mrb[0].mxu0
        %566 = vdwg.mxu0
        %v567 = vadd.f32 %v561, %v564
        %v568 = vrot.slane %v567, 4
        %v569 = vadd.f32 %v567, %v568
        %v570 = vrot.slane %v569, 2
        %v571 = vadd.f32 %v569, %v570
        %v572 = vrot.slane %v571, 1
        %v573 = vadd.f32 %v571, %v572
        %v574 = vmul.f32 %v573, 0.0625
        %v575 = vmul.f32 %v561, %v561
        %v576 = vmul.f32 %v564, %v564
        %v577 = vadd.f32 %v575, %v576
        %v578 = vrot.slane %v577, 4
        %v579 = vadd.f32 %v577, %v578
        %v580 = vrot.slane %v579, 2
        %v581 = vadd.f32 %v579, %v580
        %v582 = vrot.slane %v581, 1
        %v583 = vadd.f32 %v581, %v582
        %v584 = vmul.f32 %v583, 0.0625
        %v585 = vmul.f32 %v574, %v574
        %v586 = vsub.f32 %v584, %v585
        %v587 = vmax.f32 %v586, 0.0
        %v588 = vsub.f32 %v561, %v574
        %v589 = vsub.f32 %v564, %v574
        %v590 = vadd.f32 %v587, 1e-05
        %v591 = vrsqrt.pop %v590
        %v592 = vmul.f32 %v588, %v591
        %v593 = vmul.f32 %v589, %v591
        %v594 = vld [vmem:[%s381] sm:$0x1]
        %v596 = vlaneseq
        %v597 = vshrl.u32 %v596, 7
        %v598 = vsub.s32 0, %v597
        %v599 = vrot.slane %v594, %v598
        %v601 = vmul.f32 %v592, %v599
        %v602 = vmul.f32 %v593, %v599
        %v603 = vld [vmem:[%s384] sm:$0x1]
        %v605 = vlaneseq
        %v606 = vshrl.u32 %v605, 7
        %v607 = vsub.s32 0, %v606
        %v608 = vrot.slane %v603, %v607
        %v610 = vadd.f32 %v601, %v608
        %v611 = vadd.f32 %v602, %v608
        %612 = vst [vmem:[%s378] sm:$0xff] %v610
        %613 = vst [vmem:[%s378 + $0x8] sm:$0xff] %v611
        %s614 = sand.u32 %s122, 1
        %s615 = sand.u32 %s122, 1
        %s616 = smul.addr %s615, 16
        %s617 = scalar_lea.vmem [#allocation3], %s616
        // Predicated region
        $region78: #{_lambda_.9} parent=72 // pred_check
          %p618 = pneg %p132
        $region79: #{_lambda_.9} parent=72 // pred_check_branch
          %620 = sbr.rel (%p618) target = $region81
        $region80: #{_lambda_.9} parent=72 // pred_region
          %s621 = smul.addr %s15, 8
          %s622 = scalar_lea.vmem %s4, %s621
          // Predicated region
          $region82: #{_lambda_.9} parent=80 // pred_check
            _
          $region83: #{_lambda_.9} parent=80 // pred_check_branch
            %624 = sbr.rel (0) target = $region85
          $region84: #{_lambda_.9} parent=80 // pred_region
            // Predicated region
            $region86: #{_lambda_.9} parent=84 // pred_check
              _
            $region87: #{_lambda_.9} parent=84 // pred_check_branch
              %626 = sbr.rel (0) target = $region89
            $region88: #{_lambda_.9} parent=84 // pred_region
              // Predicated region
              $region101: #{_lambda_.9} parent=88 // pred_check
                _
              $region102: #{_lambda_.9} parent=88 // pred_check_branch
                %643 = sbr.rel (0) target = $region104
              $region103: #{_lambda_.9} parent=88 // pred_region
                loop: start=0, step=1, limit=1
                $region105: #{_lambda_.9} parent=103 // loop_pre_header
                  _
                $region106: #{_lambda_.9} parent=103 // loop_header
                  %s645 = sphi 0, %s649
                  %p646 = scmp.ge.s32.totalorder %s645, 1
                  %s650 = sphi %s617, %s617
                  %s651 = sphi %s622, %s622
                $region107: #{_lambda_.9} parent=103 // loop_header_branch
                  %648 = sbr.rel (%p646) target = $region111
                $region108: #{_lambda_.9} parent=103 // loop_body
                  %v652 = vld [vmem:[%s650] sm:$0xff]
                  %653 = vst [vmem:[%s651] sm:$0xff] %v652
                  %v654 = vld [vmem:[%s650 + $0x8] sm:$0xff]
                  %655 = vst [vmem:[%s651 + $0x38] sm:$0xff] %v654
                $region109: #{_lambda_.9} parent=103 // loop_footer
                  %s649 = sadd.s32 1, %s645
                $region110: #{_lambda_.9} parent=103 // loop_footer_branch
                  %644 = sbr.rel target = $region106
                $region111: #{_lambda_.9} parent=103 // loop_exit
                  _
              $region104: #{_lambda_.9} parent=88 // pred_fallthru
                _
              // Predicated region
              $region112: #{_lambda_.9} parent=88 // pred_check
                _
              $region113: #{_lambda_.9} parent=88 // pred_check_branch
                %657 = sbr.rel target = $region115
              $region114: #{_lambda_.9} parent=88 // pred_region
                _
              $region115: #{_lambda_.9} parent=88 // pred_fallthru
                _
            $region89: #{_lambda_.9} parent=84 // pred_fallthru
              _
            // Predicated region
            $region90: #{_lambda_.9} parent=84 // pred_check
              _
            $region91: #{_lambda_.9} parent=84 // pred_check_branch
              %628 = sbr.rel target = $region93
            $region92: #{_lambda_.9} parent=84 // pred_region
              loop: start=0, step=1, limit=1
              $region94: #{_lambda_.9} parent=92 // loop_pre_header
                _
              $region95: #{_lambda_.9} parent=92 // loop_header
                %s631 = sphi 0, %s635
                %p632 = scmp.ge.s32.totalorder %s631, 1
                %s636 = sphi %s617, %s617
                %s637 = sphi %s622, %s622
              $region96: #{_lambda_.9} parent=92 // loop_header_branch
                %634 = sbr.rel (%p632) target = $region100
              $region97: #{_lambda_.9} parent=92 // loop_body
                %v638 = vld [vmem:[%s636] sm:$0xff]
                %639 = vst [vmem:[%s637] sm:$0xff] %v638
                %v640 = vld [vmem:[%s636 + $0x8] sm:$0xff]
                %641 = vst [vmem:[%s637 + $0x38] sm:$0xff] %v640
              $region98: #{_lambda_.9} parent=92 // loop_footer
                %s635 = sadd.s32 1, %s631
              $region99: #{_lambda_.9} parent=92 // loop_footer_branch
                %630 = sbr.rel target = $region95
              $region100: #{_lambda_.9} parent=92 // loop_exit
                _
            $region93: #{_lambda_.9} parent=84 // pred_fallthru
              _
          $region85: #{_lambda_.9} parent=80 // pred_fallthru
            _
          %658 = vnop
        $region81: #{_lambda_.9} parent=72 // pred_fallthru
          _
      $region73: #{_lambda_.9} parent=5 // pred_fallthru
        _
      %p659 = scmp.le.s32.totalorder 2, %s10
      // Predicated region
      $region116: #{_lambda_.9} parent=5 // pred_check
        %p660 = pneg %p659
      $region117: #{_lambda_.9} parent=5 // pred_check_branch
        %662 = sbr.rel (%p660) target = $region119
      $region118: #{_lambda_.9} parent=5 // pred_region
        %s663 = ssub.s32 %s10, 2
        // Predicated region
        $region120: #{_lambda_.9} parent=118 // pred_check
          %p664 = pneg %p138
        $region121: #{_lambda_.9} parent=118 // pred_check_branch
          %666 = sbr.rel (%p664) target = $region123
        $region122: #{_lambda_.9} parent=118 // pred_region
          %s667 = sand.u32 %s123, 1
          %s668 = sand.u32 %s123, 1
          %s669 = smul.addr %s668, 16
          %s670 = scalar_lea.vmem [#allocation3], %s669
        $region123: #{_lambda_.9} parent=118 // pred_fallthru
          _
      $region119: #{_lambda_.9} parent=5 // pred_fallthru
        _
    $region6: #{_lambda_.9} parent=1 // loop_footer
      %s14 = sadd.s32 1, %s10
    $region7: #{_lambda_.9} parent=1 // loop_footer_branch
      %9 = sbr.rel target = $region3
    $region8: #{_lambda_.9} parent=1 // loop_exit
      _

</llo_original>
